<compile_context>
chip_gen: v7x
topology: tpu7x:2x2x1
jax: 0.10.0
libtpu: 0.0.40
codegen_flags: <defaults>
</compile_context>

<pallas_src>
from dataclasses import dataclass

import jax
import jax.numpy as jnp
from jax.experimental import pallas as pl
from jax.experimental.pallas import tpu as pltpu


# -----------------------------------------------------------------------------
# Fused kernels
#   grid = (B // tb, S // ts);  axis 0 "parallel", axis 1 "arbitrary" (reduce)
#   ids_ref   : [tb, ts, 1] i32   (token ids chunk)
#   aux_ref   : mean -> mask chunk  [tb, ts, 1] f32
#               last -> last_idx    [tb, 1]     i32
#   table_ref : [V, H]  bf16 (resident across grid)
#   w_ref     : [H, H]  bf16 (resident)
#   b_ref     : [1, H]  f32  (resident)
#   o_ref     : [tb, H] f32  (written on last seq chunk only)
#   acc_ref   : [tb, H] f32  VMEM scratch accumulator
#   cnt_ref   : [tb, 1] f32  VMEM scratch token count (mean only)
# -----------------------------------------------------------------------------
def _embed_dense_tanh(ids_ref, table_ref, w_ref, b_ref):
    """One [tb, ts] chunk: embed lookup + dense + tanh -> [tb, ts, H] f32.

    The lookup is a one-hot MXU matmul (exact: a single 1.0 * bf16 product per
    output element), so the embedded-token tensor never touches HBM.
    """
    ids = ids_ref[...]                                            # [tb, ts, 1] i32
    tb, ts, _ = ids.shape
    V, H = table_ref.shape
    pos = jax.lax.broadcasted_iota(jnp.int32, (tb, ts, V), 2)
    onehot = jnp.where(pos == ids, 1.0, 0.0).astype(table_ref.dtype)   # [tb, ts, V] bf16
    x = jnp.dot(onehot.reshape(tb * ts, V), table_ref[...],
                preferred_element_type=jnp.float32)               # gather == E[ids], f32
    h = jnp.dot(x.astype(jnp.bfloat16), w_ref[...],
                preferred_element_type=jnp.float32)               # MXU dense, f32 acc
    h = jnp.tanh(h + b_ref[...])                                  # f32 epilogue (v5e-safe)
    return h.reshape(tb, ts, H)


def _l2_normalize(v):
    # F.normalize(x, dim=1, eps=1e-12)  ==  x * rsqrt(max(||x||^2, 1e-24))
    sq = jnp.sum(v * v, axis=1, keepdims=True)
    return v * jax.lax.rsqrt(jnp.maximum(sq, 1e-24))


def _fused_mean_pool_kernel(ids_ref, mask_ref, table_ref, w_ref, b_ref,
                            o_ref, acc_ref, cnt_ref):
    si = pl.program_id(1)

    @pl.when(si == 0)
    def _():
        acc_ref[...] = jnp.zeros_like(acc_ref)
        cnt_ref[...] = jnp.zeros_like(cnt_ref)

    h = _embed_dense_tanh(ids_ref, table_ref, w_ref, b_ref)   # [tb, ts, H] f32
    m = mask_ref[...]                                          # [tb, ts, 1] f32
    acc_ref[...] += jnp.sum(h * m, axis=1)                     # masked sum  [tb, H]
    cnt_ref[...] += jnp.sum(m, axis=1)                         # token count [tb, 1]

    @pl.when(si == pl.num_programs(1) - 1)
    def _():
        # torch.clamp(sum_mask, min=1e-9) then divide, then F.normalize
        pooled = acc_ref[...] / jnp.maximum(cnt_ref[...], 1e-9)
        o_ref[...] = _l2_normalize(pooled)


def _fused_last_token_kernel(ids_ref, lastidx_ref, table_ref, w_ref, b_ref,
                             o_ref, acc_ref):
    si = pl.program_id(1)

    @pl.when(si == 0)
    def _():
        acc_ref[...] = jnp.zeros_like(acc_ref)

    h = _embed_dense_tanh(ids_ref, table_ref, w_ref, b_ref)    # [tb, ts, H] f32
    tb, ts, _ = h.shape
    # global token position of each element of this chunk
    pos = si * ts + jax.lax.broadcasted_iota(jnp.int32, (tb, ts), 1)
    sel = (pos == lastidx_ref[...]).astype(jnp.float32)        # [tb, ts] one-hot (chunk)
    acc_ref[...] += jnp.sum(h * sel[:, :, None], axis=1)       # select last token's state

    @pl.when(si == pl.num_programs(1) - 1)
    def _():
        # Rows with an all-zero attention_mask (last_idx = -1) select nothing
        # and produce a zero vector.
        o_ref[...] = _l2_normalize(acc_ref[...])


# -----------------------------------------------------------------------------
# Wrapper
# -----------------------------------------------------------------------------
def fused_embed_pool_normalize(ids, aux, table, w, b, *, strategy, tb, ts):
    """ids: [B, S, 1] i32; aux: mask [B,S,1] f32 or last_idx [B,1] i32."""
    B, S, _ = ids.shape
    V, H = table.shape
    assert B % tb == 0 and S % ts == 0, "tile sizes must divide (B, S)"
    grid = (B // tb, S // ts)

    ids_spec = pl.BlockSpec((tb, ts, 1), lambda bi, si: (bi, si, 0))
    tab_spec = pl.BlockSpec((V, H), lambda bi, si: (0, 0))       # resident
    w_spec = pl.BlockSpec((H, H), lambda bi, si: (0, 0))         # resident
    b_spec = pl.BlockSpec((1, H), lambda bi, si: (0, 0))         # resident
    out_spec = pl.BlockSpec((tb, H), lambda bi, si: (bi, 0))     # lane-dense (H % 128 == 0)

    if strategy == "mean_pooling":
        kernel = _fused_mean_pool_kernel
        aux_spec = pl.BlockSpec((tb, ts, 1), lambda bi, si: (bi, si, 0))
        scratch = [pltpu.VMEM((tb, H), jnp.float32),
                   pltpu.VMEM((tb, 1), jnp.float32)]
    else:
        kernel = _fused_last_token_kernel
        aux_spec = pl.BlockSpec((tb, 1), lambda bi, si: (bi, 0))
        scratch = [pltpu.VMEM((tb, H), jnp.float32)]

    return pl.pallas_call(
        kernel,
        out_shape=jax.ShapeDtypeStruct((B, H), jnp.float32),
        grid_spec=pltpu.PrefetchScalarGridSpec(
            num_scalar_prefetch=0,
            grid=grid,
            in_specs=[ids_spec, aux_spec, tab_spec, w_spec, b_spec],
            out_specs=out_spec,
            scratch_shapes=scratch,
        ),
        compiler_params=pltpu.CompilerParams(
            # batch axis sharded across TCs (v7x megacore); seq axis is the
            # accumulation axis -> "arbitrary"
            dimension_semantics=("parallel", "arbitrary"),
            # conservative budget (fits v7x 64 MiB/TC); at real sizes tune
            # tb/ts so double-buffered tiles stay well inside it
            vmem_limit_bytes=32 * 1024 * 1024,
        ),
    )(ids, aux, table, w, b)


# -----------------------------------------------------------------------------
# Module equivalent
# -----------------------------------------------------------------------------
@dataclass
class EmbeddingConfig:
    vocab_size: int = 64
    hidden: int = 128                       # multiple of 128 -> lane-dense MXU tiles
    pooling_strategy: str = "mean_pooling"  # or "last_token"
    batch_tile: int = 8
    seq_tile: int = 16                      # bf16 sublane-native chunk


class EmbeddingPallasModel:
    """JAX/Pallas equivalent of EmbeddingPytorchModel.forward.

    The transformer backbone (AutoModel.from_pretrained) has no direct Pallas
    equivalent; it is replaced by a deterministic synthetic per-token feature
    extractor (embedding lookup + dense + tanh).  Embedding lookup + dense +
    tanh + pooling + L2 normalize all run as ONE fused Pallas kernel.
    """
    # TODO(synk): pretrained AutoModel backbone is not translatable to a single
    # Pallas kernel; a synthetic feature extractor stands in for it.
    # TODO(synk): the in-kernel one-hot MXU gather is only appropriate for a
    # tiny vocab; a real vocab would need a manual DMA row-gather
    # (memory_space=pl.ANY + pltpu.make_async_copy).

    def __init__(self, config: EmbeddingConfig, key):
        self.config = config
        k1, k2, k3 = jax.random.split(key, 3)
        H = config.hidden
        # bf16 table/weights -> MXU bf16 path (f32 accumulation inside the kernel)
        self.embed_table = (jax.random.normal(k1, (config.vocab_size, H), jnp.float32)
                            * 0.02).astype(jnp.bfloat16)
        self.w = (jax.random.normal(k2, (H, H), jnp.float32) * 0.05).astype(jnp.bfloat16)
        self.b = jax.random.normal(k3, (1, H), jnp.float32) * 0.01

    def forward(self, batch):
        input_ids = batch["input_ids"].astype(jnp.int32)
        mask = batch["attention_mask"].astype(jnp.int32)
        ids3 = input_ids[:, :, None]                                       # [B, S, 1]
        if self.config.pooling_strategy == "mean_pooling":
            aux = mask.astype(jnp.float32)[:, :, None]                     # [B, S, 1]
        else:
            aux = (jnp.sum(mask, axis=1) - 1).astype(jnp.int32)[:, None]   # [B, 1]
        return fused_embed_pool_normalize(
            ids3, aux, self.embed_table, self.w, self.b,
            strategy=self.config.pooling_strategy,
            tb=self.config.batch_tile, ts=self.config.seq_tile,
        )

    __call__ = forward


# -----------------------------------------------------------------------------
# Demo / smoke test
# -----------------------------------------------------------------------------
if __name__ == "__main__":
    B, S, H, V = 8, 32, 128, 64
    key = jax.random.PRNGKey(0)
    k_ids, k_model = jax.random.split(key)

    input_ids = jax.random.randint(k_ids, (B, S), 0, V, dtype=jnp.int32)
    # ragged lengths (including some short rows)
    lengths = jnp.array([S, 5, 17, 1, 32, 9, 23, 16], dtype=jnp.int32)
    attention_mask = (jnp.arange(S)[None, :] < lengths[:, None]).astype(jnp.int32)
    batch = {"input_ids": input_ids, "attention_mask": attention_mask}

    ok = True
    for strategy in ("mean_pooling", "last_token"):
        model = EmbeddingPallasModel(
            EmbeddingConfig(vocab_size=V, hidden=H, pooling_strategy=strategy,
                            batch_tile=B, seq_tile=16),
            k_model,
        )
        out = jax.block_until_ready(model(batch))

        # pure-JAX reference (same bf16-rounded table/weights, f32 math)
        x32 = jnp.take(model.embed_table, input_ids.reshape(-1), axis=0
                       ).reshape(B, S, H).astype(jnp.float32)
        w32 = model.w.astype(jnp.float32)
        feat = jnp.tanh(x32.reshape(B * S, H) @ w32 + model.b).reshape(B, S, H)
        maskf = attention_mask.astype(jnp.float32)[:, :, None]
        if strategy == "mean_pooling":
            pooled = (feat * maskf).sum(1) / jnp.maximum(maskf.sum(1), 1e-9)
        else:
            idx = attention_mask.sum(1) - 1
            pooled = feat[jnp.arange(B), idx]
        ref = pooled / jnp.maximum(
            jnp.sqrt((pooled * pooled).sum(1, keepdims=True)), 1e-12)

        ok &= out.shape == (B, H)
        ok &= bool(jnp.allclose(out, ref, atol=1e-2, rtol=1e-2))

    print("KERNEL_OK" if ok else "MISMATCH")
</pallas_src>

<mosaic_0001>
module attributes {stable_mosaic.version = 11 : i64} {
  func.func @_fused_mean_pool_kernel(%arg0: i32, %arg1: i32, %arg2: memref<8x16x1xi32, #tpu.memory_space<vmem>>, %arg3: memref<8x16x1xf32, #tpu.memory_space<vmem>>, %arg4: memref<64x128xbf16, #tpu.memory_space<vmem>>, %arg5: memref<128x128xbf16, #tpu.memory_space<vmem>>, %arg6: memref<1x128xf32, #tpu.memory_space<vmem>>, %arg7: memref<8x128xf32, #tpu.memory_space<vmem>>, %arg8: memref<8x128xf32, #tpu.memory_space<vmem>>, %arg9: memref<8x1xf32, #tpu.memory_space<vmem>>) attributes {dimension_semantics = [#tpu.dimension_semantics<parallel>, #tpu.dimension_semantics<arbitrary>], iteration_bounds = array<i64: 1, 2>, scalar_prefetch = 0 : i64, scratch_operands = 2 : i64, tpu.core_type = #tpu.core_type<tc>, window_params = [{transform_indices = @transform_0, window_bounds = array<i64: 8, 16, 1>}, {transform_indices = @transform_1, window_bounds = array<i64: 8, 16, 1>}, {pipeline_mode = #tpu.pipeline_mode<synchronous>, transform_indices = @transform_2, window_bounds = array<i64: 64, 128>}, {pipeline_mode = #tpu.pipeline_mode<synchronous>, transform_indices = @transform_3, window_bounds = array<i64: 128, 128>}, {pipeline_mode = #tpu.pipeline_mode<synchronous>, transform_indices = @transform_4, window_bounds = array<i64: 1, 128>}, {transform_indices = @transform_5, window_bounds = array<i64: 8, 128>}]} {
    %c0_i32 = arith.constant 0 : i32
    %0 = arith.cmpi eq, %arg1, %c0_i32 : i32
    %1 = arith.extui %0 : i1 to i32
    %c0_i32_0 = arith.constant 0 : i32
    %2 = arith.cmpi ne, %1, %c0_i32_0 : i32
    scf.if %2 {
      %cst_26 = arith.constant 0.000000e+00 : f32
      %36 = vector.broadcast %cst_26 : f32 to vector<8x128xf32>
      %c0_27 = arith.constant 0 : index
      %c0_28 = arith.constant 0 : index
      %37 = vector.load %arg8[%c0_27, %c0_28] : memref<8x128xf32, #tpu.memory_space<vmem>>, vector<8x128xf32>
      tpu.vector_store %arg8[%c0_27, %c0_28], %36 {strides = array<i32>} : memref<8x128xf32, #tpu.memory_space<vmem>>, vector<8x128xf32>,
      %cst_29 = arith.constant 0.000000e+00 : f32
      %38 = vector.broadcast %cst_29 : f32 to vector<8x1xf32>
      %c0_30 = arith.constant 0 : index
      %c0_31 = arith.constant 0 : index
      %39 = vector.load %arg9[%c0_30, %c0_31] : memref<8x1xf32, #tpu.memory_space<vmem>>, vector<8x1xf32>
      tpu.vector_store %arg9[%c0_30, %c0_31], %38 {strides = array<i32>} : memref<8x1xf32, #tpu.memory_space<vmem>>, vector<8x1xf32>,
    } else {
    }
    %c0 = arith.constant 0 : index
    %c0_1 = arith.constant 0 : index
    %c0_2 = arith.constant 0 : index
    %3 = vector.load %arg2[%c0, %c0_1, %c0_2] : memref<8x16x1xi32, #tpu.memory_space<vmem>>, vector<8x16x1xi32>
    %4 = tpu.iota {dimensions = array<i32: 2>} : vector<8x16x64xi32>
    %5 = vector.broadcast %3 : vector<8x16x1xi32> to vector<8x16x64xi32>
    %6 = arith.cmpi eq, %4, %5 : vector<8x16x64xi32>
    %cst = arith.constant 1.000000e+00 : f32
    %cst_3 = arith.constant 0.000000e+00 : f32
    %7 = vector.broadcast %cst : f32 to vector<8x16x64xf32>
    %8 = vector.broadcast %cst_3 : f32 to vector<8x16x64xf32>
    %9 = arith.select %6, %7, %8 : vector<8x16x64xi1>, vector<8x16x64xf32>
    %10 = arith.truncf %9 : vector<8x16x64xf32> to vector<8x16x64xbf16>
    %11 = vector.shape_cast %10 : vector<8x16x64xbf16> to vector<128x64xbf16>
    %c0_4 = arith.constant 0 : index
    %c0_5 = arith.constant 0 : index
    %12 = vector.load %arg4[%c0_4, %c0_5] : memref<64x128xbf16, #tpu.memory_space<vmem>>, vector<64x128xbf16>
    %cst_6 = arith.constant dense<0.000000e+00> : vector<128x128xf32>
    %13 = tpu.matmul %11, %12, %cst_6 {dimension_numbers = #tpu.dot_dimension_numbers<[1], [0], [0], [1], [0, 0, 1, 1], [], []>} : vector<128x64xbf16>, vector<64x128xbf16>, vector<128x128xf32> -> vector<128x128xf32>
    %14 = arith.truncf %13 : vector<128x128xf32> to vector<128x128xbf16>
    %c0_7 = arith.constant 0 : index
    %c0_8 = arith.constant 0 : index
    %15 = vector.load %arg5[%c0_7, %c0_8] : memref<128x128xbf16, #tpu.memory_space<vmem>>, vector<128x128xbf16>
    %cst_9 = arith.constant dense<0.000000e+00> : vector<128x128xf32>
    %16 = tpu.matmul %14, %15, %cst_9 {dimension_numbers = #tpu.dot_dimension_numbers<[1], [0], [0], [1], [0, 0, 1, 1], [], []>} : vector<128x128xbf16>, vector<128x128xbf16>, vector<128x128xf32> -> vector<128x128xf32>
    %c0_10 = arith.constant 0 : index
    %c0_11 = arith.constant 0 : index
    %17 = vector.load %arg6[%c0_10, %c0_11] : memref<1x128xf32, #tpu.memory_space<vmem>>, vector<1x128xf32>
    %18 = vector.broadcast %17 : vector<1x128xf32> to vector<128x128xf32>
    %19 = arith.addf %16, %18 : vector<128x128xf32>
    %20 = math.tanh %19 : vector<128x128xf32>
    %21 = vector.shape_cast %20 : vector<128x128xf32> to vector<8x16x128xf32>
    %c0_12 = arith.constant 0 : index
    %c0_13 = arith.constant 0 : index
    %c0_14 = arith.constant 0 : index
    %22 = vector.load %arg3[%c0_12, %c0_13, %c0_14] : memref<8x16x1xf32, #tpu.memory_space<vmem>>, vector<8x16x1xf32>
    %c0_15 = arith.constant 0 : index
    %c0_16 = arith.constant 0 : index
    %23 = vector.load %arg8[%c0_15, %c0_16] : memref<8x128xf32, #tpu.memory_space<vmem>>, vector<8x128xf32>
    %24 = vector.broadcast %22 : vector<8x16x1xf32> to vector<8x16x128xf32>
    %25 = arith.mulf %21, %24 : vector<8x16x128xf32>
    %cst_17 = arith.constant dense<0.000000e+00> : vector<8x128xf32>
    %26 = vector.multi_reduction <add>, %25, %cst_17 [1] : vector<8x16x128xf32> to vector<8x128xf32>
    %27 = arith.addf %23, %26 : vector<8x128xf32>
    %c0_18 = arith.constant 0 : index
    %c0_19 = arith.constant 0 : index
    %28 = vector.load %arg8[%c0_18, %c0_19] : memref<8x128xf32, #tpu.memory_space<vmem>>, vector<8x128xf32>
    tpu.vector_store %arg8[%c0_18, %c0_19], %27 {strides = array<i32>} : memref<8x128xf32, #tpu.memory_space<vmem>>, vector<8x128xf32>,
    %c0_20 = arith.constant 0 : index
    %c0_21 = arith.constant 0 : index
    %29 = vector.load %arg9[%c0_20, %c0_21] : memref<8x1xf32, #tpu.memory_space<vmem>>, vector<8x1xf32>
    %cst_22 = arith.constant dense<0.000000e+00> : vector<8x1xf32>
    %30 = vector.multi_reduction <add>, %22, %cst_22 [1] : vector<8x16x1xf32> to vector<8x1xf32>
    %31 = arith.addf %29, %30 : vector<8x1xf32>
    %c0_23 = arith.constant 0 : index
    %c0_24 = arith.constant 0 : index
    %32 = vector.load %arg9[%c0_23, %c0_24] : memref<8x1xf32, #tpu.memory_space<vmem>>, vector<8x1xf32>
    tpu.vector_store %arg9[%c0_23, %c0_24], %31 {strides = array<i32>} : memref<8x1xf32, #tpu.memory_space<vmem>>, vector<8x1xf32>,
    %c1_i32 = arith.constant 1 : i32
    %33 = arith.cmpi eq, %arg1, %c1_i32 : i32
    %34 = arith.extui %33 : i1 to i32
    %c0_i32_25 = arith.constant 0 : i32
    %35 = arith.cmpi ne, %34, %c0_i32_25 : i32
    scf.if %35 {
      %c0_26 = arith.constant 0 : index
      %c0_27 = arith.constant 0 : index
      %36 = vector.load %arg8[%c0_26, %c0_27] : memref<8x128xf32, #tpu.memory_space<vmem>>, vector<8x128xf32>
      %c0_28 = arith.constant 0 : index
      %c0_29 = arith.constant 0 : index
      %37 = vector.load %arg9[%c0_28, %c0_29] : memref<8x1xf32, #tpu.memory_space<vmem>>, vector<8x1xf32>
      %cst_30 = arith.constant 9.99999971E-10 : f32
      %38 = vector.broadcast %cst_30 : f32 to vector<8x1xf32>
      %39 = arith.maximumf %37, %38 : vector<8x1xf32>
      %40 = vector.broadcast %39 : vector<8x1xf32> to vector<8x128xf32>
      %41 = arith.divf %36, %40 : vector<8x128xf32>
      %42 = arith.mulf %41, %41 : vector<8x128xf32>
      %cst_31 = arith.constant dense<0.000000e+00> : vector<8xf32>
      %43 = vector.multi_reduction <add>, %42, %cst_31 [1] : vector<8x128xf32> to vector<8xf32>
      %44 = vector.shape_cast %43 : vector<8xf32> to vector<8x1xf32>
      %cst_32 = arith.constant 1.000000e-24 : f32
      %45 = vector.broadcast %cst_32 : f32 to vector<8x1xf32>
      %46 = arith.maximumf %44, %45 : vector<8x1xf32>
      %47 = math.rsqrt %46 : vector<8x1xf32>
      %48 = vector.broadcast %47 : vector<8x1xf32> to vector<8x128xf32>
      %49 = arith.mulf %41, %48 : vector<8x128xf32>
      %c0_33 = arith.constant 0 : index
      %c0_34 = arith.constant 0 : index
      %50 = vector.load %arg7[%c0_33, %c0_34] : memref<8x128xf32, #tpu.memory_space<vmem>>, vector<8x128xf32>
      tpu.vector_store %arg7[%c0_33, %c0_34], %49 {strides = array<i32>} : memref<8x128xf32, #tpu.memory_space<vmem>>, vector<8x128xf32>,
    } else {
    }
    return
  }
  func.func @transform_0(%arg0: i32, %arg1: i32) -> (i32, i32, i32) {
    %c0_i32 = arith.constant 0 : i32
    %c0_i32_0 = arith.constant 0 : i32
    return %arg0, %arg1, %c0_i32 : i32, i32, i32
  }
  func.func @transform_1(%arg0: i32, %arg1: i32) -> (i32, i32, i32) {
    %c0_i32 = arith.constant 0 : i32
    %c0_i32_0 = arith.constant 0 : i32
    return %arg0, %arg1, %c0_i32 : i32, i32, i32
  }
  func.func @transform_2(%arg0: i32, %arg1: i32) -> (i32, i32) {
    %c0_i32 = arith.constant 0 : i32
    %c0_i32_0 = arith.constant 0 : i32
    %c0_i32_1 = arith.constant 0 : i32
    return %c0_i32, %c0_i32_0 : i32, i32
  }
  func.func @transform_3(%arg0: i32, %arg1: i32) -> (i32, i32) {
    %c0_i32 = arith.constant 0 : i32
    %c0_i32_0 = arith.constant 0 : i32
    %c0_i32_1 = arith.constant 0 : i32
    return %c0_i32, %c0_i32_0 : i32, i32
  }
  func.func @transform_4(%arg0: i32, %arg1: i32) -> (i32, i32) {
    %c0_i32 = arith.constant 0 : i32
    %c0_i32_0 = arith.constant 0 : i32
    %c0_i32_1 = arith.constant 0 : i32
    return %c0_i32, %c0_i32_0 : i32, i32
  }
  func.func @transform_5(%arg0: i32, %arg1: i32) -> (i32, i32) {
    %c0_i32 = arith.constant 0 : i32
    %c0_i32_0 = arith.constant 0 : i32
    return %arg0, %c0_i32 : i32, i32
  }
}

</mosaic_0001>

<llo_original>
// kernel: tpu_custom_call.1
$region0: #{tpu_custom_call.1}
  #allocation0 [shape = 'u32[]', space=smem, size = 0x4, offset = 0x4, fixed_abs, tag = 'smem constant byte address 0x4 - core index']
  #allocation1 [shape = 'u32[144,128]{1,0:T(1,128)}', space=vmem, size = 0x12000, scoped, tag = 'internal scratch']
  #allocation2 [shape = 'f32[8,128]{1,0:T(8,128)}', space=vmem, size = 0x1000, scoped, tag = 'scratch operand']
  #allocation3 [shape = 'f32[8,1]{1,0:T(8,128)}', space=vmem, size = 0x1000, scoped, tag = 'scratch operand']
  %s0 = inlined_call_operand.vmem [shape: s32[8,32,1], index: 0, kind: input, shape index: {}]
  %s1 = inlined_call_operand.vmem [shape: f32[8,32,1], index: 1, kind: input, shape index: {}]
  %s2 = inlined_call_operand.vmem [shape: bf16[64,128], index: 2, kind: input, shape index: {}]
  %s3 = inlined_call_operand.vmem [shape: bf16[128,128], index: 3, kind: input, shape index: {}]
  %s4 = inlined_call_operand.vmem [shape: f32[1,128], index: 4, kind: input, shape index: {}]
  %s5 = inlined_call_operand.hbm [shape: f32[8,128], index: 5, kind: output, shape index: {}]
  %s6 = sld [smem:[#allocation0]]
  $region137: #{tpu_custom_call.1} parent=0
    _
  %s8 = ssub.s32 1, %s6
  %s9 = scalar_select 0, %s8, %s6
  $region1: #{tpu_custom_call.1} parent=0
    #allocation4 [shape = 'u8[131072]{0}', space=vmem, size = 0x20000, scoped, tag = 'input window, operand 0']
    #allocation5 [shape = 'u8[131072]{0}', space=vmem, size = 0x20000, scoped, tag = 'input window, operand 1']
    #allocation6 [shape = 'u8[4096]{0}', space=vmem, size = 0x1000, scoped, tag = 'output window, operand 0, single buffered']
    #allocation7 [shape = 's32[2]{0}', space=sflag, size = 0x8, scoped, tag = 'scoped memory for tpu_custom_call.1']
    %10 = vsyncpa [#allocation7], 0
    loop: start=0, step=1, limit=4
    $region2: #{tpu_custom_call.1} parent=1 // loop_pre_header
      _
    $region3: #{tpu_custom_call.1} parent=1 // loop_header
      %s12 = sphi 0, %s16
      %p13 = scmp.ge.s32.totalorder %s12, 4
      %s19 = sphi 0, %s31
      %s20 = sphi 0, %s27
      %s21 = sphi 0, %s19
      %s22 = sphi 0, %s20
      %s23 = sphi 0, %s21
      %s24 = sphi 0, %s22
      %s36 = sphi 0, %s38
      %s39 = sphi 0, %s36
      %s40 = sphi 0, %s39
      %s56 = sphi 0, %s40
      %s64 = sphi 0, %s66
      %s67 = sphi 0, %s64
      %s68 = sphi 0, %s67
      %s84 = sphi 0, %s68
      %s88 = sphi 0, %s88
      %s90 = sphi 0, %s88
      %s91 = sphi 0, %s90
      %s105 = sphi 0, %s91
      %s109 = sphi 0, %s109
      %s111 = sphi 0, %s109
      %s112 = sphi 0, %s111
      %s126 = sphi 0, %s112
      %s130 = sphi 0, %s130
      %s132 = sphi 0, %s130
      %s133 = sphi 0, %s132
      %s147 = sphi 0, %s133
      %s153 = sphi 0, %s155
      %s156 = sphi 0, %s153
      %s157 = sphi 0, %s156
      %s173 = sphi 0, %s157
    $region4: #{tpu_custom_call.1} parent=1 // loop_header_branch
      %15 = sbr.rel (%p13) target = $region8
    $region5: #{tpu_custom_call.1} parent=1 // loop_body
      %s17 = ssub.s32 %s12, 1
      %s18 = ssub.s32 %s12, 2
      %s25 = sadd.s32 1, %s20
      %p26 = scmp.ge.s32.totalorder %s25, 2
      %s27 = scalar_select %p26, 0, %s25
      %s28 = sadd.s32 1, %s19
      %s29 = scalar_select %p26, %s28, %s19
      %p30 = scmp.ge.s32.totalorder %s29, 1
      %s31 = scalar_select %p30, 0, %s29
      %s32 = ssub.s32 %s19, %s31
      %s33 = ssub.s32 %s20, %s27
      %s34 = sor.u32 %s32, %s33
      %p35 = scmp.eq.s32.totalorder %s34, 0
      %s37 = sadd.s32 %s36, 1
      %s38 = scalar_select %p35, %s36, %s37
      %p41 = pneg %p35
      %p42 = scmp.eq.s32.totalorder %s12, 1
      %p43 = por %p41, %p42
      %p44 = scmp.ne.s32.totalorder %s36, %s39
      %p45 = scmp.eq.s32.totalorder %s12, 0
      %p46 = por %p44, %p45
      %p47 = scmp.ne.s32.totalorder %s36, %s39
      %p48 = scmp.eq.s32.totalorder %s17, 1
      %p49 = por %p47, %p48
      %p50 = scmp.ne.s32.totalorder %s39, %s40
      %p51 = scmp.eq.s32.totalorder %s17, 0
      %p52 = por %p50, %p51
      %p53 = scmp.ne.s32.totalorder %s39, %s40
      %p54 = scmp.eq.s32.totalorder %s18, 1
      %p55 = por %p53, %p54
      %p57 = scmp.ne.s32.totalorder %s40, %s56
      %p58 = scmp.eq.s32.totalorder %s18, 0
      %p59 = por %p57, %p58
      %s60 = ssub.s32 %s19, %s31
      %s61 = ssub.s32 %s20, %s27
      %s62 = sor.u32 %s60, %s61
      %p63 = scmp.eq.s32.totalorder %s62, 0
      %s65 = sadd.s32 %s64, 1
      %s66 = scalar_select %p63, %s64, %s65
      %p69 = pneg %p63
      %p70 = scmp.eq.s32.totalorder %s12, 1
      %p71 = por %p69, %p70
      %p72 = scmp.ne.s32.totalorder %s64, %s67
      %p73 = scmp.eq.s32.totalorder %s12, 0
      %p74 = por %p72, %p73
      %p75 = scmp.ne.s32.totalorder %s64, %s67
      %p76 = scmp.eq.s32.totalorder %s17, 1
      %p77 = por %p75, %p76
      %p78 = scmp.ne.s32.totalorder %s67, %s68
      %p79 = scmp.eq.s32.totalorder %s17, 0
      %p80 = por %p78, %p79
      %p81 = scmp.ne.s32.totalorder %s67, %s68
      %p82 = scmp.eq.s32.totalorder %s18, 1
      %p83 = por %p81, %p82
      %p85 = scmp.ne.s32.totalorder %s68, %s84
      %p86 = scmp.eq.s32.totalorder %s18, 0
      %p87 = por %p85, %p86
      %s89 = sadd.s32 %s88, 1
      %p92 = scmp.eq.s32.totalorder %s12, 1
      %p93 = scmp.ne.s32.totalorder %s88, %s90
      %p94 = scmp.eq.s32.totalorder %s12, 0
      %p95 = por %p93, %p94
      %p96 = scmp.ne.s32.totalorder %s88, %s90
      %p97 = scmp.eq.s32.totalorder %s17, 1
      %p98 = por %p96, %p97
      %p99 = scmp.ne.s32.totalorder %s90, %s91
      %p100 = scmp.eq.s32.totalorder %s17, 0
      %p101 = por %p99, %p100
      %p102 = scmp.ne.s32.totalorder %s90, %s91
      %p103 = scmp.eq.s32.totalorder %s18, 1
      %p104 = por %p102, %p103
      %p106 = scmp.ne.s32.totalorder %s91, %s105
      %p107 = scmp.eq.s32.totalorder %s18, 0
      %p108 = por %p106, %p107
      %s110 = sadd.s32 %s109, 1
      %p113 = scmp.eq.s32.totalorder %s12, 1
      %p114 = scmp.ne.s32.totalorder %s109, %s111
      %p115 = scmp.eq.s32.totalorder %s12, 0
      %p116 = por %p114, %p115
      %p117 = scmp.ne.s32.totalorder %s109, %s111
      %p118 = scmp.eq.s32.totalorder %s17, 1
      %p119 = por %p117, %p118
      %p120 = scmp.ne.s32.totalorder %s111, %s112
      %p121 = scmp.eq.s32.totalorder %s17, 0
      %p122 = por %p120, %p121
      %p123 = scmp.ne.s32.totalorder %s111, %s112
      %p124 = scmp.eq.s32.totalorder %s18, 1
      %p125 = por %p123, %p124
      %p127 = scmp.ne.s32.totalorder %s112, %s126
      %p128 = scmp.eq.s32.totalorder %s18, 0
      %p129 = por %p127, %p128
      %s131 = sadd.s32 %s130, 1
      %p134 = scmp.eq.s32.totalorder %s12, 1
      %p135 = scmp.ne.s32.totalorder %s130, %s132
      %p136 = scmp.eq.s32.totalorder %s12, 0
      %p137 = por %p135, %p136
      %p138 = scmp.ne.s32.totalorder %s130, %s132
      %p139 = scmp.eq.s32.totalorder %s17, 1
      %p140 = por %p138, %p139
      %p141 = scmp.ne.s32.totalorder %s132, %s133
      %p142 = scmp.eq.s32.totalorder %s17, 0
      %p143 = por %p141, %p142
      %p144 = scmp.ne.s32.totalorder %s132, %s133
      %p145 = scmp.eq.s32.totalorder %s18, 1
      %p146 = por %p144, %p145
      %p148 = scmp.ne.s32.totalorder %s133, %s147
      %p149 = scmp.eq.s32.totalorder %s18, 0
      %p150 = por %p148, %p149
      %s151 = ssub.s32 %s19, %s31
      %p152 = scmp.eq.s32.totalorder %s151, 0
      %s154 = sadd.s32 %s153, 1
      %s155 = scalar_select %p152, %s153, %s154
      %p158 = pneg %p152
      %p159 = scmp.eq.s32.totalorder %s12, 1
      %p160 = por %p158, %p159
      %p161 = scmp.ne.s32.totalorder %s153, %s156
      %p162 = scmp.eq.s32.totalorder %s12, 0
      %p163 = por %p161, %p162
      %p164 = scmp.ne.s32.totalorder %s153, %s156
      %p165 = scmp.eq.s32.totalorder %s17, 1
      %p166 = por %p164, %p165
      %p167 = scmp.ne.s32.totalorder %s156, %s157
      %p168 = scmp.eq.s32.totalorder %s17, 0
      %p169 = por %p167, %p168
      %p170 = scmp.ne.s32.totalorder %s156, %s157
      %p171 = scmp.eq.s32.totalorder %s18, 1
      %p172 = por %p170, %p171
      %p174 = scmp.ne.s32.totalorder %s157, %s173
      %p175 = scmp.eq.s32.totalorder %s18, 0
      %p176 = por %p174, %p175
      %p177 = scmp.le.s32.totalorder 1, %s12
      %p178 = scmp.lt.s32.totalorder %s12, 3
      %p179 = pnand %p177, %p178
      %p180 = pneg %p179
      // Predicated region
      $region9: #{tpu_custom_call.1} parent=5 // pred_check
        _
      $region10: #{tpu_custom_call.1} parent=5 // pred_check_branch
        %182 = sbr.rel (%p179) target = $region12
      $region11: #{tpu_custom_call.1} parent=5 // pred_region
        %s183 = ssub.s32 %s12, 1
        // Predicated region
        $region13: #{tpu_custom_call.1} parent=11 // pred_check
          %p184 = pneg %p101
        $region14: #{tpu_custom_call.1} parent=11 // pred_check_branch
          %186 = sbr.rel (%p184) target = $region16
        $region15: #{tpu_custom_call.1} parent=11 // pred_region
          _
        $region16: #{tpu_custom_call.1} parent=11 // pred_fallthru
          _
        // Predicated region
        $region17: #{tpu_custom_call.1} parent=11 // pred_check
          %p187 = pneg %p122
        $region18: #{tpu_custom_call.1} parent=11 // pred_check_branch
          %189 = sbr.rel (%p187) target = $region20
        $region19: #{tpu_custom_call.1} parent=11 // pred_region
          _
        $region20: #{tpu_custom_call.1} parent=11 // pred_fallthru
          _
        // Predicated region
        $region21: #{tpu_custom_call.1} parent=11 // pred_check
          %p190 = pneg %p143
        $region22: #{tpu_custom_call.1} parent=11 // pred_check_branch
          %192 = sbr.rel (%p190) target = $region24
        $region23: #{tpu_custom_call.1} parent=11 // pred_region
          _
        $region24: #{tpu_custom_call.1} parent=11 // pred_fallthru
          _
      $region12: #{tpu_custom_call.1} parent=5 // pred_fallthru
        _
      %p193 = scmp.lt.s32.totalorder %s12, 2
      // Predicated region
      $region25: #{tpu_custom_call.1} parent=5 // pred_check
        %p194 = pneg %p193
      $region26: #{tpu_custom_call.1} parent=5 // pred_check_branch
        %196 = sbr.rel (%p194) target = $region28
      $region27: #{tpu_custom_call.1} parent=5 // pred_region
        // Predicated region
        $region29: #{tpu_custom_call.1} parent=27 // pred_check
          %p197 = pneg %p46
        $region30: #{tpu_custom_call.1} parent=27 // pred_check_branch
          %199 = sbr.rel (%p197) target = $region32
        $region31: #{tpu_custom_call.1} parent=27 // pred_region
          %s200 = sand.u32 %s36, 1
          %s201 = sand.u32 %s36, 1
          %s202 = smul.addr %s201, 128
          %s203 = scalar_lea.vmem [#allocation4], %s202
          %s204 = smul.u32 8, %s19
          %s205 = smul.u32 2, %s20
          %s206 = smul.addr %s204, 4
          %s207 = sadd.s32 %s205, %s206
          %s208 = smul.addr %s207, 8
          %s209 = scalar_lea.vmem %s0, %s208
          // Predicated region
          $region33: #{tpu_custom_call.1} parent=31 // pred_check
            _
          $region34: #{tpu_custom_call.1} parent=31 // pred_check_branch
            %211 = sbr.rel (0) target = $region36
          $region35: #{tpu_custom_call.1} parent=31 // pred_region
            // Predicated region
            $region37: #{tpu_custom_call.1} parent=35 // pred_check
              _
            $region38: #{tpu_custom_call.1} parent=35 // pred_check_branch
              %213 = sbr.rel (0) target = $region40
            $region39: #{tpu_custom_call.1} parent=35 // pred_region
              // Predicated region
              $region52: #{tpu_custom_call.1} parent=39 // pred_check
                _
              $region53: #{tpu_custom_call.1} parent=39 // pred_check_branch
                %258 = sbr.rel (0) target = $region55
              $region54: #{tpu_custom_call.1} parent=39 // pred_region
                loop: start=0, step=1, limit=1
                $region56: #{tpu_custom_call.1} parent=54 // loop_pre_header
                  _
                $region57: #{tpu_custom_call.1} parent=54 // loop_header
                  %s260 = sphi 0, %s264
                  %p261 = scmp.ge.s32.totalorder %s260, 1
                  %s265 = sphi %s209, %s209
                  %s266 = sphi %s203, %s203
                $region58: #{tpu_custom_call.1} parent=54 // loop_header_branch
                  %263 = sbr.rel (%p261) target = $region62
                $region59: #{tpu_custom_call.1} parent=54 // loop_body
                  %v267 = vld [vmem:[%s265] sm:$0xff]
                  %268 = vst [vmem:[%s266] sm:$0xff] %v267
                  %v269 = vld [vmem:[%s265 + $0x8] sm:$0xff]
                  %270 = vst [vmem:[%s266 + $0x8] sm:$0xff] %v269
                  %v271 = vld [vmem:[%s265 + $0x20] sm:$0xff]
                  %272 = vst [vmem:[%s266 + $0x10] sm:$0xff] %v271
                  %v273 = vld [vmem:[%s265 + $0x28] sm:$0xff]
                  %274 = vst [vmem:[%s266 + $0x18] sm:$0xff] %v273
                  %v275 = vld [vmem:[%s265 + $0x40] sm:$0xff]
                  %276 = vst [vmem:[%s266 + $0x20] sm:$0xff] %v275
                  %v277 = vld [vmem:[%s265 + $0x48] sm:$0xff]
                  %278 = vst [vmem:[%s266 + $0x28] sm:$0xff] %v277
                  %v279 = vld [vmem:[%s265 + $0x60] sm:$0xff]
                  %280 = vst [vmem:[%s266 + $0x30] sm:$0xff] %v279
                  %v281 = vld [vmem:[%s265 + $0x68] sm:$0xff]
                  %282 = vst [vmem:[%s266 + $0x38] sm:$0xff] %v281
                  %v283 = vld [vmem:[%s265 + $0x80] sm:$0xff]
                  %284 = vst [vmem:[%s266 + $0x40] sm:$0xff] %v283
                  %v285 = vld [vmem:[%s265 + $0x88] sm:$0xff]
                  %286 = vst [vmem:[%s266 + $0x48] sm:$0xff] %v285
                  %v287 = vld [vmem:[%s265 + $0xa0] sm:$0xff]
                  %288 = vst [vmem:[%s266 + $0x50] sm:$0xff] %v287
                  %v289 = vld [vmem:[%s265 + $0xa8] sm:$0xff]
                  %290 = vst [vmem:[%s266 + $0x58] sm:$0xff] %v289
                  %v291 = vld [vmem:[%s265 + $0xc0] sm:$0xff]
                  %292 = vst [vmem:[%s266 + $0x60] sm:$0xff] %v291
                  %v293 = vld [vmem:[%s265 + $0xc8] sm:$0xff]
                  %294 = vst [vmem:[%s266 + $0x68] sm:$0xff] %v293
                  %v295 = vld [vmem:[%s265 + $0xe0] sm:$0xff]
                  %296 = vst [vmem:[%s266 + $0x70] sm:$0xff] %v295
                  %v297 = vld [vmem:[%s265 + $0xe8] sm:$0xff]
                  %298 = vst [vmem:[%s266 + $0x78] sm:$0xff] %v297
                $region60: #{tpu_custom_call.1} parent=54 // loop_footer
                  %s264 = sadd.s32 1, %s260
                $region61: #{tpu_custom_call.1} parent=54 // loop_footer_branch
                  %259 = sbr.rel target = $region57
                $region62: #{tpu_custom_call.1} parent=54 // loop_exit
                  _
              $region55: #{tpu_custom_call.1} parent=39 // pred_fallthru
                _
              // Predicated region
              $region63: #{tpu_custom_call.1} parent=39 // pred_check
                _
              $region64: #{tpu_custom_call.1} parent=39 // pred_check_branch
                %300 = sbr.rel target = $region66
              $region65: #{tpu_custom_call.1} parent=39 // pred_region
                _
              $region66: #{tpu_custom_call.1} parent=39 // pred_fallthru
                _
            $region40: #{tpu_custom_call.1} parent=35 // pred_fallthru
              _
            // Predicated region
            $region41: #{tpu_custom_call.1} parent=35 // pred_check
              _
            $region42: #{tpu_custom_call.1} parent=35 // pred_check_branch
              %215 = sbr.rel target = $region44
            $region43: #{tpu_custom_call.1} parent=35 // pred_region
              loop: start=0, step=1, limit=1
              $region45: #{tpu_custom_call.1} parent=43 // loop_pre_header
                _
              $region46: #{tpu_custom_call.1} parent=43 // loop_header
                %s218 = sphi 0, %s222
                %p219 = scmp.ge.s32.totalorder %s218, 1
                %s223 = sphi %s209, %s209
                %s224 = sphi %s203, %s203
              $region47: #{tpu_custom_call.1} parent=43 // loop_header_branch
                %221 = sbr.rel (%p219) target = $region51
              $region48: #{tpu_custom_call.1} parent=43 // loop_body
                %v225 = vld [vmem:[%s223] sm:$0xff]
                %226 = vst [vmem:[%s224] sm:$0xff] %v225
                %v227 = vld [vmem:[%s223 + $0x8] sm:$0xff]
                %228 = vst [vmem:[%s224 + $0x8] sm:$0xff] %v227
                %v229 = vld [vmem:[%s223 + $0x20] sm:$0xff]
                %230 = vst [vmem:[%s224 + $0x10] sm:$0xff] %v229
                %v231 = vld [vmem:[%s223 + $0x28] sm:$0xff]
                %232 = vst [vmem:[%s224 + $0x18] sm:$0xff] %v231
                %v233 = vld [vmem:[%s223 + $0x40] sm:$0xff]
                %234 = vst [vmem:[%s224 + $0x20] sm:$0xff] %v233
                %v235 = vld [vmem:[%s223 + $0x48] sm:$0xff]
                %236 = vst [vmem:[%s224 + $0x28] sm:$0xff] %v235
                %v237 = vld [vmem:[%s223 + $0x60] sm:$0xff]
                %238 = vst [vmem:[%s224 + $0x30] sm:$0xff] %v237
                %v239 = vld [vmem:[%s223 + $0x68] sm:$0xff]
                %240 = vst [vmem:[%s224 + $0x38] sm:$0xff] %v239
                %v241 = vld [vmem:[%s223 + $0x80] sm:$0xff]
                %242 = vst [vmem:[%s224 + $0x40] sm:$0xff] %v241
                %v243 = vld [vmem:[%s223 + $0x88] sm:$0xff]
                %244 = vst [vmem:[%s224 + $0x48] sm:$0xff] %v243
                %v245 = vld [vmem:[%s223 + $0xa0] sm:$0xff]
                %246 = vst [vmem:[%s224 + $0x50] sm:$0xff] %v245
                %v247 = vld [vmem:[%s223 + $0xa8] sm:$0xff]
                %248 = vst [vmem:[%s224 + $0x58] sm:$0xff] %v247
                %v249 = vld [vmem:[%s223 + $0xc0] sm:$0xff]
                %250 = vst [vmem:[%s224 + $0x60] sm:$0xff] %v249
                %v251 = vld [vmem:[%s223 + $0xc8] sm:$0xff]
                %252 = vst [vmem:[%s224 + $0x68] sm:$0xff] %v251
                %v253 = vld [vmem:[%s223 + $0xe0] sm:$0xff]
                %254 = vst [vmem:[%s224 + $0x70] sm:$0xff] %v253
                %v255 = vld [vmem:[%s223 + $0xe8] sm:$0xff]
                %256 = vst [vmem:[%s224 + $0x78] sm:$0xff] %v255
              $region49: #{tpu_custom_call.1} parent=43 // loop_footer
                %s222 = sadd.s32 1, %s218
              $region50: #{tpu_custom_call.1} parent=43 // loop_footer_branch
                %217 = sbr.rel target = $region46
              $region51: #{tpu_custom_call.1} parent=43 // loop_exit
                _
            $region44: #{tpu_custom_call.1} parent=35 // pred_fallthru
              _
          $region36: #{tpu_custom_call.1} parent=31 // pred_fallthru
            _
          %301 = vnop
        $region32: #{tpu_custom_call.1} parent=27 // pred_fallthru
          _
        // Predicated region
        $region67: #{tpu_custom_call.1} parent=27 // pred_check
          %p302 = pneg %p74
        $region68: #{tpu_custom_call.1} parent=27 // pred_check_branch
          %304 = sbr.rel (%p302) target = $region70
        $region69: #{tpu_custom_call.1} parent=27 // pred_region
          %s305 = sand.u32 %s64, 1
          %s306 = sand.u32 %s64, 1
          %s307 = smul.addr %s306, 128
          %s308 = scalar_lea.vmem [#allocation5], %s307
          %s309 = smul.u32 8, %s19
          %s310 = smul.u32 2, %s20
          %s311 = smul.addr %s309, 4
          %s312 = sadd.s32 %s310, %s311
          %s313 = smul.addr %s312, 8
          %s314 = scalar_lea.vmem %s1, %s313
          // Predicated region
          $region71: #{tpu_custom_call.1} parent=69 // pred_check
            _
          $region72: #{tpu_custom_call.1} parent=69 // pred_check_branch
            %316 = sbr.rel (0) target = $region74
          $region73: #{tpu_custom_call.1} parent=69 // pred_region
            // Predicated region
            $region75: #{tpu_custom_call.1} parent=73 // pred_check
              _
            $region76: #{tpu_custom_call.1} parent=73 // pred_check_branch
              %318 = sbr.rel (0) target = $region78
            $region77: #{tpu_custom_call.1} parent=73 // pred_region
              // Predicated region
              $region90: #{tpu_custom_call.1} parent=77 // pred_check
                _
              $region91: #{tpu_custom_call.1} parent=77 // pred_check_branch
                %363 = sbr.rel (0) target = $region93
              $region92: #{tpu_custom_call.1} parent=77 // pred_region
                loop: start=0, step=1, limit=1
                $region94: #{tpu_custom_call.1} parent=92 // loop_pre_header
                  _
                $region95: #{tpu_custom_call.1} parent=92 // loop_header
                  %s365 = sphi 0, %s369
                  %p366 = scmp.ge.s32.totalorder %s365, 1
                  %s370 = sphi %s314, %s314
                  %s371 = sphi %s308, %s308
                $region96: #{tpu_custom_call.1} parent=92 // loop_header_branch
                  %368 = sbr.rel (%p366) target = $region100
                $region97: #{tpu_custom_call.1} parent=92 // loop_body
                  %v372 = vld [vmem:[%s370] sm:$0xff]
                  %373 = vst [vmem:[%s371] sm:$0xff] %v372
                  %v374 = vld [vmem:[%s370 + $0x8] sm:$0xff]
                  %375 = vst [vmem:[%s371 + $0x8] sm:$0xff] %v374
                  %v376 = vld [vmem:[%s370 + $0x20] sm:$0xff]
                  %377 = vst [vmem:[%s371 + $0x10] sm:$0xff] %v376
                  %v378 = vld [vmem:[%s370 + $0x28] sm:$0xff]
                  %379 = vst [vmem:[%s371 + $0x18] sm:$0xff] %v378
                  %v380 = vld [vmem:[%s370 + $0x40] sm:$0xff]
                  %381 = vst [vmem:[%s371 + $0x20] sm:$0xff] %v380
                  %v382 = vld [vmem:[%s370 + $0x48] sm:$0xff]
                  %383 = vst [vmem:[%s371 + $0x28] sm:$0xff] %v382
                  %v384 = vld [vmem:[%s370 + $0x60] sm:$0xff]
                  %385 = vst [vmem:[%s371 + $0x30] sm:$0xff] %v384
                  %v386 = vld [vmem:[%s370 + $0x68] sm:$0xff]
                  %387 = vst [vmem:[%s371 + $0x38] sm:$0xff] %v386
                  %v388 = vld [vmem:[%s370 + $0x80] sm:$0xff]
                  %389 = vst [vmem:[%s371 + $0x40] sm:$0xff] %v388
                  %v390 = vld [vmem:[%s370 + $0x88] sm:$0xff]
                  %391 = vst [vmem:[%s371 + $0x48] sm:$0xff] %v390
                  %v392 = vld [vmem:[%s370 + $0xa0] sm:$0xff]
                  %393 = vst [vmem:[%s371 + $0x50] sm:$0xff] %v392
                  %v394 = vld [vmem:[%s370 + $0xa8] sm:$0xff]
                  %395 = vst [vmem:[%s371 + $0x58] sm:$0xff] %v394
                  %v396 = vld [vmem:[%s370 + $0xc0] sm:$0xff]
                  %397 = vst [vmem:[%s371 + $0x60] sm:$0xff] %v396
                  %v398 = vld [vmem:[%s370 + $0xc8] sm:$0xff]
                  %399 = vst [vmem:[%s371 + $0x68] sm:$0xff] %v398
                  %v400 = vld [vmem:[%s370 + $0xe0] sm:$0xff]
                  %401 = vst [vmem:[%s371 + $0x70] sm:$0xff] %v400
                  %v402 = vld [vmem:[%s370 + $0xe8] sm:$0xff]
                  %403 = vst [vmem:[%s371 + $0x78] sm:$0xff] %v402
                $region98: #{tpu_custom_call.1} parent=92 // loop_footer
                  %s369 = sadd.s32 1, %s365
                $region99: #{tpu_custom_call.1} parent=92 // loop_footer_branch
                  %364 = sbr.rel target = $region95
                $region100: #{tpu_custom_call.1} parent=92 // loop_exit
                  _
              $region93: #{tpu_custom_call.1} parent=77 // pred_fallthru
                _
              // Predicated region
              $region101: #{tpu_custom_call.1} parent=77 // pred_check
                _
              $region102: #{tpu_custom_call.1} parent=77 // pred_check_branch
                %405 = sbr.rel target = $region104
              $region103: #{tpu_custom_call.1} parent=77 // pred_region
                _
              $region104: #{tpu_custom_call.1} parent=77 // pred_fallthru
                _
            $region78: #{tpu_custom_call.1} parent=73 // pred_fallthru
              _
            // Predicated region
            $region79: #{tpu_custom_call.1} parent=73 // pred_check
              _
            $region80: #{tpu_custom_call.1} parent=73 // pred_check_branch
              %320 = sbr.rel target = $region82
            $region81: #{tpu_custom_call.1} parent=73 // pred_region
              loop: start=0, step=1, limit=1
              $region83: #{tpu_custom_call.1} parent=81 // loop_pre_header
                _
              $region84: #{tpu_custom_call.1} parent=81 // loop_header
                %s323 = sphi 0, %s327
                %p324 = scmp.ge.s32.totalorder %s323, 1
                %s328 = sphi %s314, %s314
                %s329 = sphi %s308, %s308
              $region85: #{tpu_custom_call.1} parent=81 // loop_header_branch
                %326 = sbr.rel (%p324) target = $region89
              $region86: #{tpu_custom_call.1} parent=81 // loop_body
                %v330 = vld [vmem:[%s328] sm:$0xff]
                %331 = vst [vmem:[%s329] sm:$0xff] %v330
                %v332 = vld [vmem:[%s328 + $0x8] sm:$0xff]
                %333 = vst [vmem:[%s329 + $0x8] sm:$0xff] %v332
                %v334 = vld [vmem:[%s328 + $0x20] sm:$0xff]
                %335 = vst [vmem:[%s329 + $0x10] sm:$0xff] %v334
                %v336 = vld [vmem:[%s328 + $0x28] sm:$0xff]
                %337 = vst [vmem:[%s329 + $0x18] sm:$0xff] %v336
                %v338 = vld [vmem:[%s328 + $0x40] sm:$0xff]
                %339 = vst [vmem:[%s329 + $0x20] sm:$0xff] %v338
                %v340 = vld [vmem:[%s328 + $0x48] sm:$0xff]
                %341 = vst [vmem:[%s329 + $0x28] sm:$0xff] %v340
                %v342 = vld [vmem:[%s328 + $0x60] sm:$0xff]
                %343 = vst [vmem:[%s329 + $0x30] sm:$0xff] %v342
                %v344 = vld [vmem:[%s328 + $0x68] sm:$0xff]
                %345 = vst [vmem:[%s329 + $0x38] sm:$0xff] %v344
                %v346 = vld [vmem:[%s328 + $0x80] sm:$0xff]
                %347 = vst [vmem:[%s329 + $0x40] sm:$0xff] %v346
                %v348 = vld [vmem:[%s328 + $0x88] sm:$0xff]
                %349 = vst [vmem:[%s329 + $0x48] sm:$0xff] %v348
                %v350 = vld [vmem:[%s328 + $0xa0] sm:$0xff]
                %351 = vst [vmem:[%s329 + $0x50] sm:$0xff] %v350
                %v352 = vld [vmem:[%s328 + $0xa8] sm:$0xff]
                %353 = vst [vmem:[%s329 + $0x58] sm:$0xff] %v352
                %v354 = vld [vmem:[%s328 + $0xc0] sm:$0xff]
                %355 = vst [vmem:[%s329 + $0x60] sm:$0xff] %v354
                %v356 = vld [vmem:[%s328 + $0xc8] sm:$0xff]
                %357 = vst [vmem:[%s329 + $0x68] sm:$0xff] %v356
                %v358 = vld [vmem:[%s328 + $0xe0] sm:$0xff]
                %359 = vst [vmem:[%s329 + $0x70] sm:$0xff] %v358
                %v360 = vld [vmem:[%s328 + $0xe8] sm:$0xff]
                %361 = vst [vmem:[%s329 + $0x78] sm:$0xff] %v360
              $region87: #{tpu_custom_call.1} parent=81 // loop_footer
                %s327 = sadd.s32 1, %s323
              $region88: #{tpu_custom_call.1} parent=81 // loop_footer_branch
                %322 = sbr.rel target = $region84
              $region89: #{tpu_custom_call.1} parent=81 // loop_exit
                _
            $region82: #{tpu_custom_call.1} parent=73 // pred_fallthru
              _
          $region74: #{tpu_custom_call.1} parent=69 // pred_fallthru
            _
          %406 = vnop
        $region70: #{tpu_custom_call.1} parent=27 // pred_fallthru
          _
      $region28: #{tpu_custom_call.1} parent=5 // pred_fallthru
        _
      %p407 = scmp.le.s32.totalorder 1, %s12
      %p408 = scmp.lt.s32.totalorder %s12, 3
      %p409 = pnand %p407, %p408
      %p410 = pneg %p409
      // Predicated region
      $region105: #{tpu_custom_call.1} parent=5 // pred_check
        _
      $region106: #{tpu_custom_call.1} parent=5 // pred_check_branch
        %412 = sbr.rel (%p409) target = $region108
      $region107: #{tpu_custom_call.1} parent=5 // pred_region
        %s413 = ssub.s32 %s12, 1
        %s414 = sand.u32 %s39, 1
        %s415 = sand.u32 %s39, 1
        %s416 = smul.addr %s415, 128
        %s417 = scalar_lea.vmem [#allocation4], %s416
        // Predicated region
        $region109: #{tpu_custom_call.1} parent=107 // pred_check
          %p418 = pneg %p52
        $region110: #{tpu_custom_call.1} parent=107 // pred_check_branch
          %420 = sbr.rel (%p418) target = $region112
        $region111: #{tpu_custom_call.1} parent=107 // pred_region
          _
        $region112: #{tpu_custom_call.1} parent=107 // pred_fallthru
          _
        %s421 = sand.u32 %s67, 1
        %s422 = sand.u32 %s67, 1
        %s423 = smul.addr %s422, 128
        %s424 = scalar_lea.vmem [#allocation5], %s423
        // Predicated region
        $region113: #{tpu_custom_call.1} parent=107 // pred_check
          %p425 = pneg %p80
        $region114: #{tpu_custom_call.1} parent=107 // pred_check_branch
          %427 = sbr.rel (%p425) target = $region116
        $region115: #{tpu_custom_call.1} parent=107 // pred_region
          _
        $region116: #{tpu_custom_call.1} parent=107 // pred_fallthru
          _
        %s428 = sand.u32 %s39, 1
        %s429 = sand.u32 %s39, 1
        %s430 = smul.addr %s429, 128
        %s431 = scalar_lea.vmem [#allocation4], %s430
        %p432 = pneg %p52
        %p433 = pneg %p49
        %s434 = sand.u32 %s67, 1
        %s435 = sand.u32 %s67, 1
        %s436 = smul.addr %s435, 128
        %s437 = scalar_lea.vmem [#allocation5], %s436
        %p438 = pneg %p80
        %p439 = pneg %p77
        %p440 = pneg %p101
        %p441 = pneg %p98
        %p442 = pneg %p122
        %p443 = pneg %p119
        %p444 = pneg %p143
        %p445 = pneg %p140
        %p446 = pneg %p169
        %p447 = pneg %p166
        %s448 = smul.u32 8, %s21
        %s449 = smul.u32 2, %s22
        %s450 = smul.u32 8, %s21
        %s451 = smul.u32 2, %s22
        %p453 = scmp.eq.s32.totalorder %s22, 0
        // Predicated region
        $region117: #{tpu_custom_call.1} parent=107 // pred_check
          %p454 = pneg %p453
        $region118: #{tpu_custom_call.1} parent=107 // pred_check_branch
          %456 = sbr.rel (%p454) target = $region120
        $region119: #{tpu_custom_call.1} parent=107 // pred_region
          %457 = vst [vmem:[#allocation2] sm:$0xff] 0.0
          %vm458 = vcmask 7168
          %459 = vst.msk [vmem:[#allocation3] sm:$0xff] %vm458, 0.0
        $region120: #{tpu_custom_call.1} parent=107 // pred_fallthru
          _
        %v460 = vld [vmem:[%s417] sm:$0xff]
        %v461 = vld [vmem:[%s417 + $0x8] sm:$0xff]
        %v462 = vld [vmem:[%s417 + $0x10] sm:$0xff]
        %v463 = vld [vmem:[%s417 + $0x18] sm:$0xff]
        %v464 = vld [vmem:[%s417 + $0x20] sm:$0xff]
        %v465 = vld [vmem:[%s417 + $0x28] sm:$0xff]
        %v466 = vld [vmem:[%s417 + $0x30] sm:$0xff]
        %v467 = vld [vmem:[%s417 + $0x38] sm:$0xff]
        %v468 = vld [vmem:[%s417 + $0x40] sm:$0xff]
        %v469 = vld [vmem:[%s417 + $0x48] sm:$0xff]
        %v470 = vld [vmem:[%s417 + $0x50] sm:$0xff]
        %v471 = vld [vmem:[%s417 + $0x58] sm:$0xff]
        %v472 = vld [vmem:[%s417 + $0x60] sm:$0xff]
        %v473 = vld [vmem:[%s417 + $0x68] sm:$0xff]
        %v474 = vld [vmem:[%s417 + $0x70] sm:$0xff]
        %v475 = vld [vmem:[%s417 + $0x78] sm:$0xff]
        %v476 = vlaneseq
        %v477 = vand.u32 %v476, 127
        %478 = vset.pattern.permute.xlu0 0
        %479 = vperm.xlu0 %478, %v460
        %v480 = vpop.permute.xlu0 %479
        %481 = vset.pattern.permute.xlu0 0
        %482 = vperm.xlu0 %481, %v461
        %v483 = vpop.permute.xlu0 %482
        %484 = vset.pattern.permute.xlu0 0
        %485 = vperm.xlu0 %484, %v462
        %v486 = vpop.permute.xlu0 %485
        %487 = vset.pattern.permute.xlu0 0
        %488 = vperm.xlu0 %487, %v463
        %v489 = vpop.permute.xlu0 %488
        %490 = vset.pattern.permute.xlu0 0
        %491 = vperm.xlu0 %490, %v464
        %v492 = vpop.permute.xlu0 %491
        %493 = vset.pattern.permute.xlu0 0
        %494 = vperm.xlu0 %493, %v465
        %v495 = vpop.permute.xlu0 %494
        %496 = vset.pattern.permute.xlu0 0
        %497 = vperm.xlu0 %496, %v466
        %v498 = vpop.permute.xlu0 %497
        %499 = vset.pattern.permute.xlu0 0
        %500 = vperm.xlu0 %499, %v467
        %v501 = vpop.permute.xlu0 %500
        %502 = vset.pattern.permute.xlu0 0
        %503 = vperm.xlu0 %502, %v468
        %v504 = vpop.permute.xlu0 %503
        %505 = vset.pattern.permute.xlu0 0
        %506 = vperm.xlu0 %505, %v469
        %v507 = vpop.permute.xlu0 %506
        %508 = vset.pattern.permute.xlu0 0
        %509 = vperm.xlu0 %508, %v470
        %v510 = vpop.permute.xlu0 %509
        %511 = vset.pattern.permute.xlu0 0
        %512 = vperm.xlu0 %511, %v471
        %v513 = vpop.permute.xlu0 %512
        %514 = vset.pattern.permute.xlu0 0
        %515 = vperm.xlu0 %514, %v472
        %v516 = vpop.permute.xlu0 %515
        %517 = vset.pattern.permute.xlu0 0
        %518 = vperm.xlu0 %517, %v473
        %v519 = vpop.permute.xlu0 %518
        %520 = vset.pattern.permute.xlu0 0
        %521 = vperm.xlu0 %520, %v474
        %v522 = vpop.permute.xlu0 %521
        %523 = vset.pattern.permute.xlu0 0
        %524 = vperm.xlu0 %523, %v475
        %v525 = vpop.permute.xlu0 %524
        %vm526 = vcmp.eq.s32.totalorder %v477, %v480
        %vm527 = vcmp.eq.s32.totalorder %v477, %v483
        %vm528 = vcmp.eq.s32.totalorder %v477, %v486
        %vm529 = vcmp.eq.s32.totalorder %v477, %v489
        %vm530 = vcmp.eq.s32.totalorder %v477, %v492
        %vm531 = vcmp.eq.s32.totalorder %v477, %v495
        %vm532 = vcmp.eq.s32.totalorder %v477, %v498
        %vm533 = vcmp.eq.s32.totalorder %v477, %v501
        %vm534 = vcmp.eq.s32.totalorder %v477, %v504
        %vm535 = vcmp.eq.s32.totalorder %v477, %v507
        %vm536 = vcmp.eq.s32.totalorder %v477, %v510
        %vm537 = vcmp.eq.s32.totalorder %v477, %v513
        %vm538 = vcmp.eq.s32.totalorder %v477, %v516
        %vm539 = vcmp.eq.s32.totalorder %v477, %v519
        %vm540 = vcmp.eq.s32.totalorder %v477, %v522
        %vm541 = vcmp.eq.s32.totalorder %v477, %v525
        %v542 = vsel %vm526, 1.0, 0.0
        %v543 = vsel %vm527, 1.0, 0.0
        %v544 = vsel %vm528, 1.0, 0.0
        %v545 = vsel %vm529, 1.0, 0.0
        %v546 = vsel %vm530, 1.0, 0.0
        %v547 = vsel %vm531, 1.0, 0.0
        %v548 = vsel %vm532, 1.0, 0.0
        %v549 = vsel %vm533, 1.0, 0.0
        %v550 = vsel %vm534, 1.0, 0.0
        %v551 = vsel %vm535, 1.0, 0.0
        %v552 = vsel %vm536, 1.0, 0.0
        %v553 = vsel %vm537, 1.0, 0.0
        %v554 = vsel %vm538, 1.0, 0.0
        %v555 = vsel %vm539, 1.0, 0.0
        %v556 = vsel %vm540, 1.0, 0.0
        %v557 = vsel %vm541, 1.0, 0.0
        %v558 = vpack.c.bf16 %v543, %v542
        %v559 = vpack.c.bf16 %v545, %v544
        %v560 = vpack.c.bf16 %v547, %v546
        %v561 = vpack.c.bf16 %v549, %v548
        %v562 = vpack.c.bf16 %v551, %v550
        %v563 = vpack.c.bf16 %v553, %v552
        %v564 = vpack.c.bf16 %v555, %v554
        %v565 = vpack.c.bf16 %v557, %v556
        %v566 = vld [vmem:[%s2] sm:$0xf]
        %v567 = vld [vmem:[%s2 + $0x4] sm:$0xf]
        %v568 = vld [vmem:[%s2 + $0x8] sm:$0xf]
        %v569 = vld [vmem:[%s2 + $0xc] sm:$0xf]
        %v570 = vld [vmem:[%s2 + $0x10] sm:$0xf]
        %v571 = vld [vmem:[%s2 + $0x14] sm:$0xf]
        %v572 = vld [vmem:[%s2 + $0x18] sm:$0xf]
        %v573 = vld [vmem:[%s2 + $0x1c] sm:$0xf]
        %v582 = vunpack.c.l.b16 %v566
        %v583 = vunpack.c.l.b16 %v567
        %v584 = vunpack.c.l.b16 %v568
        %v585 = vunpack.c.l.b16 %v569
        %v586 = vunpack.c.l.b16 %v570
        %v587 = vunpack.c.l.b16 %v571
        %v588 = vunpack.c.l.b16 %v572
        %v589 = vunpack.c.l.b16 %v573
        %v590 = vpack.c.b16 %v583, %v582
        %v591 = vpack.c.b16 %v585, %v584
        %v592 = vpack.c.b16 %v587, %v586
        %v593 = vpack.c.b16 %v589, %v588
        %vm598 = vcmask 523264
        %v600 = vsel %vm598, %v558, 0
        %v603 = vsel %vm598, %v559, 0
        %v606 = vsel %vm598, %v560, 0
        %v609 = vsel %vm598, %v561, 0
        %v612 = vsel %vm598, %v562, 0
        %v615 = vsel %vm598, %v563, 0
        %v618 = vsel %vm598, %v564, 0
        %v621 = vsel %vm598, %v565, 0
        %623 = vmatprep.subr.bf16.mxu0 0
        %624 = vmatpush1.bf16.msra.mxu0 %v590
        %625 = vmatprep.subr.bf16.mxu0 0
        %626 = vmatpush1.bf16.msra.mxu0 %v591
        %627 = vmatprep.subr.bf16.mxu0 0
        %628 = vmatpush1.bf16.msra.mxu0 %v592
        %629 = vmatprep.subr.bf16.mxu0 0
        %630 = vmatpush1.bf16.msra.mxu0 %v593
        %631 = vmatprep.subr.bf16.mxu0 0
        %632 = vmatpush1.bf16.msra.mxu0 0
        %633 = vmatprep.subr.bf16.mxu0 0
        %634 = vmatpush1.bf16.msra.mxu0 0
        %635 = vmatprep.subr.bf16.mxu0 0
        %636 = vmatpush1.bf16.msra.mxu0 0
        %637 = vmatprep.subr.bf16.mxu0 0
        %638 = vmatpush1.bf16.msra.mxu0 0
        %639 = vmatprep.subr.bf16.mxu0 0
        %640 = vmatpush1.bf16.msra.mxu0 0
        %641 = vmatprep.subr.bf16.mxu0 0
        %642 = vmatpush1.bf16.msra.mxu0 0
        %643 = vmatprep.subr.bf16.mxu0 0
        %644 = vmatpush1.bf16.msra.mxu0 0
        %645 = vmatprep.subr.bf16.mxu0 0
        %646 = vmatpush1.bf16.msra.mxu0 0
        %647 = vmatprep.subr.bf16.mxu0 0
        %648 = vmatpush1.bf16.msra.mxu0 0
        %649 = vmatprep.subr.bf16.mxu0 0
        %650 = vmatpush1.bf16.msra.mxu0 0
        %651 = vmatprep.subr.bf16.mxu0 0
        %652 = vmatpush1.bf16.msra.mxu0 0
        %653 = vmatprep.subr.bf16.mxu0 0
        %654 = vmatpush1.bf16.msra.mxu0 0
        %655 = vmatprep.mubr.bf16.mxu0 0
        %656 = vmatmul.mubr.bf16.gmra.mrb[0].mxu0 %v600
        %v657 = vpop.f32.mrb[0].mxu0
        %v658 = vadd.f32 0.0, %v657
        %v659 = vpop.f32.mrb[0].mxu0
        %v660 = vpop.f32.mrb[0].mxu0
        %v661 = vadd.f32 0.0, %v660
        %v662 = vpop.f32.mrb[0].mxu0
        %663 = vmatprep.mubr.bf16.mxu0 0
        %664 = vmatmul.mubr.bf16.gmra.mrb[0].mxu0 %v603
        %v665 = vpop.f32.mrb[0].mxu0
        %v666 = vadd.f32 0.0, %v665
        %v667 = vpop.f32.mrb[0].mxu0
        %v668 = vpop.f32.mrb[0].mxu0
        %v669 = vadd.f32 0.0, %v668
        %v670 = vpop.f32.mrb[0].mxu0
        %671 = vmatprep.mubr.bf16.mxu0 0
        %672 = vmatmul.mubr.bf16.gmra.mrb[0].mxu0 %v606
        %v673 = vpop.f32.mrb[0].mxu0
        %v674 = vadd.f32 0.0, %v673
        %v675 = vpop.f32.mrb[0].mxu0
        %v676 = vpop.f32.mrb[0].mxu0
        %v677 = vadd.f32 0.0, %v676
        %v678 = vpop.f32.mrb[0].mxu0
        %679 = vmatprep.mubr.bf16.mxu0 0
        %680 = vmatmul.mubr.bf16.gmra.mrb[0].mxu0 %v609
        %v681 = vpop.f32.mrb[0].mxu0
        %v682 = vadd.f32 0.0, %v681
        %v683 = vpop.f32.mrb[0].mxu0
        %v684 = vpop.f32.mrb[0].mxu0
        %v685 = vadd.f32 0.0, %v684
        %v686 = vpop.f32.mrb[0].mxu0
        %687 = vmatprep.mubr.bf16.mxu0 0
        %688 = vmatmul.mubr.bf16.gmra.mrb[0].mxu0 %v612
        %v689 = vpop.f32.mrb[0].mxu0
        %v690 = vadd.f32 0.0, %v689
        %v691 = vpop.f32.mrb[0].mxu0
        %v692 = vpop.f32.mrb[0].mxu0
        %v693 = vadd.f32 0.0, %v692
        %v694 = vpop.f32.mrb[0].mxu0
        %695 = vmatprep.mubr.bf16.mxu0 0
        %696 = vmatmul.mubr.bf16.gmra.mrb[0].mxu0 %v615
        %v697 = vpop.f32.mrb[0].mxu0
        %v698 = vadd.f32 0.0, %v697
        %v699 = vpop.f32.mrb[0].mxu0
        %v700 = vpop.f32.mrb[0].mxu0
        %v701 = vadd.f32 0.0, %v700
        %v702 = vpop.f32.mrb[0].mxu0
        %703 = vmatprep.mubr.bf16.mxu0 0
        %704 = vmatmul.mubr.bf16.gmra.mrb[0].mxu0 %v618
        %v705 = vpop.f32.mrb[0].mxu0
        %v706 = vadd.f32 0.0, %v705
        %v707 = vpop.f32.mrb[0].mxu0
        %v708 = vpop.f32.mrb[0].mxu0
        %v709 = vadd.f32 0.0, %v708
        %v710 = vpop.f32.mrb[0].mxu0
        %711 = vmatprep.mubr.bf16.mxu0 0
        %712 = vmatmul.mubr.bf16.gmra.mrb[0].mxu0 %v621
        %v713 = vpop.f32.mrb[0].mxu0
        %v714 = vadd.f32 0.0, %v713
        %v715 = vpop.f32.mrb[0].mxu0
        %v716 = vpop.f32.mrb[0].mxu0
        %v717 = vadd.f32 0.0, %v716
        %v718 = vpop.f32.mrb[0].mxu0
        %719 = vdwg.mxu0
        %v720 = vpack.c.bf16 %v661, %v658
        %v721 = vpack.c.bf16 %v669, %v666
        %v722 = vpack.c.bf16 %v677, %v674
        %v723 = vpack.c.bf16 %v685, %v682
        %v724 = vpack.c.bf16 %v693, %v690
        %v725 = vpack.c.bf16 %v701, %v698
        %v726 = vpack.c.bf16 %v709, %v706
        %v727 = vpack.c.bf16 %v717, %v714
        %v728 = vld [vmem:[%s3] sm:$0xf]
        %v729 = vld [vmem:[%s3 + $0x4] sm:$0xf]
        %v730 = vld [vmem:[%s3 + $0x8] sm:$0xf]
        %v731 = vld [vmem:[%s3 + $0xc] sm:$0xf]
        %v732 = vld [vmem:[%s3 + $0x10] sm:$0xf]
        %v733 = vld [vmem:[%s3 + $0x14] sm:$0xf]
        %v734 = vld [vmem:[%s3 + $0x18] sm:$0xf]
        %v735 = vld [vmem:[%s3 + $0x1c] sm:$0xf]
        %v736 = vld [vmem:[%s3 + $0x20] sm:$0xf]
        %v737 = vld [vmem:[%s3 + $0x24] sm:$0xf]
        %v738 = vld [vmem:[%s3 + $0x28] sm:$0xf]
        %v739 = vld [vmem:[%s3 + $0x2c] sm:$0xf]
        %v740 = vld [vmem:[%s3 + $0x30] sm:$0xf]
        %v741 = vld [vmem:[%s3 + $0x34] sm:$0xf]
        %v742 = vld [vmem:[%s3 + $0x38] sm:$0xf]
        %v743 = vld [vmem:[%s3 + $0x3c] sm:$0xf]
        %v744 = vld [vmem:[%s4] sm:$0x1]
        %v746 = vlaneseq
        %v747 = vshrl.u32 %v746, 7
        %v748 = vsub.s32 0, %v747
        %v749 = vrot.slane %v744, %v748
        %v767 = vunpack.c.l.b16 %v728
        %v768 = vunpack.c.l.b16 %v729
        %v769 = vunpack.c.l.b16 %v730
        %v770 = vunpack.c.l.b16 %v731
        %v771 = vunpack.c.l.b16 %v732
        %v772 = vunpack.c.l.b16 %v733
        %v773 = vunpack.c.l.b16 %v734
        %v774 = vunpack.c.l.b16 %v735
        %v775 = vunpack.c.l.b16 %v736
        %v776 = vunpack.c.l.b16 %v737
        %v777 = vunpack.c.l.b16 %v738
        %v778 = vunpack.c.l.b16 %v739
        %v779 = vunpack.c.l.b16 %v740
        %v780 = vunpack.c.l.b16 %v741
        %v781 = vunpack.c.l.b16 %v742
        %v782 = vunpack.c.l.b16 %v743
        %v783 = vpack.c.b16 %v768, %v767
        %v784 = vpack.c.b16 %v770, %v769
        %v785 = vpack.c.b16 %v772, %v771
        %v786 = vpack.c.b16 %v774, %v773
        %v787 = vpack.c.b16 %v776, %v775
        %v788 = vpack.c.b16 %v778, %v777
        %v789 = vpack.c.b16 %v780, %v779
        %v790 = vpack.c.b16 %v782, %v781
        %799 = vmatprep.subr.bf16.mxu0 0
        %800 = vmatpush1.bf16.msra.mxu0 %v783
        %801 = vmatprep.subr.bf16.mxu0 0
        %802 = vmatpush1.bf16.msra.mxu0 %v784
        %803 = vmatprep.subr.bf16.mxu0 0
        %804 = vmatpush1.bf16.msra.mxu0 %v785
        %805 = vmatprep.subr.bf16.mxu0 0
        %806 = vmatpush1.bf16.msra.mxu0 %v786
        %807 = vmatprep.subr.bf16.mxu0 0
        %808 = vmatpush1.bf16.msra.mxu0 %v787
        %809 = vmatprep.subr.bf16.mxu0 0
        %810 = vmatpush1.bf16.msra.mxu0 %v788
        %811 = vmatprep.subr.bf16.mxu0 0
        %812 = vmatpush1.bf16.msra.mxu0 %v789
        %813 = vmatprep.subr.bf16.mxu0 0
        %814 = vmatpush1.bf16.msra.mxu0 %v790
        %815 = vmatprep.subr.bf16.mxu0 0
        %816 = vmatpush1.bf16.msra.mxu0 0
        %817 = vmatprep.subr.bf16.mxu0 0
        %818 = vmatpush1.bf16.msra.mxu0 0
        %819 = vmatprep.subr.bf16.mxu0 0
        %820 = vmatpush1.bf16.msra.mxu0 0
        %821 = vmatprep.subr.bf16.mxu0 0
        %822 = vmatpush1.bf16.msra.mxu0 0
        %823 = vmatprep.subr.bf16.mxu0 0
        %824 = vmatpush1.bf16.msra.mxu0 0
        %825 = vmatprep.subr.bf16.mxu0 0
        %826 = vmatpush1.bf16.msra.mxu0 0
        %827 = vmatprep.subr.bf16.mxu0 0
        %828 = vmatpush1.bf16.msra.mxu0 0
        %829 = vmatprep.subr.bf16.mxu0 0
        %830 = vmatpush1.bf16.msra.mxu0 0
        %831 = vmatprep.mubr.bf16.mxu0 0
        %832 = vmatmul.mubr.bf16.gmra.mrb[0].mxu0 %v720
        %v833 = vpop.f32.mrb[0].mxu0
        %v834 = vadd.f32 %v749, %v833
        %v835 = vpop.f32.mrb[0].mxu0
        %v836 = vpop.f32.mrb[0].mxu0
        %v837 = vadd.f32 %v749, %v836
        %v838 = vpop.f32.mrb[0].mxu0
        %839 = vmatprep.mubr.bf16.mxu0 0
        %840 = vmatmul.mubr.bf16.gmra.mrb[0].mxu0 %v721
        %v841 = vpop.f32.mrb[0].mxu0
        %v842 = vadd.f32 %v749, %v841
        %v843 = vpop.f32.mrb[0].mxu0
        %v844 = vpop.f32.mrb[0].mxu0
        %v845 = vadd.f32 %v749, %v844
        %v846 = vpop.f32.mrb[0].mxu0
        %847 = vmatprep.mubr.bf16.mxu0 0
        %848 = vmatmul.mubr.bf16.gmra.mrb[0].mxu0 %v722
        %v849 = vpop.f32.mrb[0].mxu0
        %v850 = vadd.f32 %v749, %v849
        %v851 = vpop.f32.mrb[0].mxu0
        %v852 = vpop.f32.mrb[0].mxu0
        %v853 = vadd.f32 %v749, %v852
        %v854 = vpop.f32.mrb[0].mxu0
        %855 = vmatprep.mubr.bf16.mxu0 0
        %856 = vmatmul.mubr.bf16.gmra.mrb[0].mxu0 %v723
        %v857 = vpop.f32.mrb[0].mxu0
        %v858 = vadd.f32 %v749, %v857
        %v859 = vpop.f32.mrb[0].mxu0
        %v860 = vpop.f32.mrb[0].mxu0
        %v861 = vadd.f32 %v749, %v860
        %v862 = vpop.f32.mrb[0].mxu0
        %863 = vmatprep.mubr.bf16.mxu0 0
        %864 = vmatmul.mubr.bf16.gmra.mrb[0].mxu0 %v724
        %v865 = vpop.f32.mrb[0].mxu0
        %v866 = vadd.f32 %v749, %v865
        %v867 = vpop.f32.mrb[0].mxu0
        %v868 = vpop.f32.mrb[0].mxu0
        %v869 = vadd.f32 %v749, %v868
        %v870 = vpop.f32.mrb[0].mxu0
        %871 = vmatprep.mubr.bf16.mxu0 0
        %872 = vmatmul.mubr.bf16.gmra.mrb[0].mxu0 %v725
        %v873 = vpop.f32.mrb[0].mxu0
        %v874 = vadd.f32 %v749, %v873
        %v875 = vpop.f32.mrb[0].mxu0
        %v876 = vpop.f32.mrb[0].mxu0
        %v877 = vadd.f32 %v749, %v876
        %v878 = vpop.f32.mrb[0].mxu0
        %879 = vmatprep.mubr.bf16.mxu0 0
        %880 = vmatmul.mubr.bf16.gmra.mrb[0].mxu0 %v726
        %v881 = vpop.f32.mrb[0].mxu0
        %v882 = vadd.f32 %v749, %v881
        %v883 = vpop.f32.mrb[0].mxu0
        %v884 = vpop.f32.mrb[0].mxu0
        %v885 = vadd.f32 %v749, %v884
        %v886 = vpop.f32.mrb[0].mxu0
        %887 = vmatprep.mubr.bf16.mxu0 0
        %888 = vmatmul.mubr.bf16.gmra.mrb[0].mxu0 %v727
        %v889 = vpop.f32.mrb[0].mxu0
        %v890 = vadd.f32 %v749, %v889
        %v891 = vpop.f32.mrb[0].mxu0
        %v892 = vpop.f32.mrb[0].mxu0
        %v893 = vadd.f32 %v749, %v892
        %v894 = vpop.f32.mrb[0].mxu0
        %895 = vdwg.mxu0
        %v896 = vtanh.pop %v834
        %v897 = vtanh.pop %v837
        %v898 = vtanh.pop %v842
        %v899 = vtanh.pop %v845
        %v900 = vtanh.pop %v850
        %v901 = vtanh.pop %v853
        %v902 = vtanh.pop %v858
        %v903 = vtanh.pop %v861
        %v904 = vtanh.pop %v866
        %v905 = vtanh.pop %v869
        %v906 = vtanh.pop %v874
        %v907 = vtanh.pop %v877
        %v908 = vtanh.pop %v882
        %v909 = vtanh.pop %v885
        %v910 = vtanh.pop %v890
        %v911 = vtanh.pop %v893
        %v912 = vld [vmem:[%s424] sm:$0xff]
        %v913 = vld [vmem:[%s424 + $0x8] sm:$0xff]
        %v914 = vld [vmem:[%s424 + $0x10] sm:$0xff]
        %v915 = vld [vmem:[%s424 + $0x18] sm:$0xff]
        %v916 = vld [vmem:[%s424 + $0x20] sm:$0xff]
        %v917 = vld [vmem:[%s424 + $0x28] sm:$0xff]
        %v918 = vld [vmem:[%s424 + $0x30] sm:$0xff]
        %v919 = vld [vmem:[%s424 + $0x38] sm:$0xff]
        %v920 = vld [vmem:[%s424 + $0x40] sm:$0xff]
        %v921 = vld [vmem:[%s424 + $0x48] sm:$0xff]
        %v922 = vld [vmem:[%s424 + $0x50] sm:$0xff]
        %v923 = vld [vmem:[%s424 + $0x58] sm:$0xff]
        %v924 = vld [vmem:[%s424 + $0x60] sm:$0xff]
        %v925 = vld [vmem:[%s424 + $0x68] sm:$0xff]
        %v926 = vld [vmem:[%s424 + $0x70] sm:$0xff]
        %v927 = vld [vmem:[%s424 + $0x78] sm:$0xff]
        %v928 = vld [vmem:[#allocation2] sm:$0xff]
        %930 = vset.pattern.permute.xlu0 0
        %931 = vperm.xlu0 %930, %v912
        %v932 = vpop.permute.xlu0 %931
        %935 = vset.pattern.permute.xlu0 0
        %936 = vperm.xlu0 %935, %v913
        %v937 = vpop.permute.xlu0 %936
        %940 = vset.pattern.permute.xlu0 0
        %941 = vperm.xlu0 %940, %v914
        %v942 = vpop.permute.xlu0 %941
        %945 = vset.pattern.permute.xlu0 0
        %946 = vperm.xlu0 %945, %v915
        %v947 = vpop.permute.xlu0 %946
        %950 = vset.pattern.permute.xlu0 0
        %951 = vperm.xlu0 %950, %v916
        %v952 = vpop.permute.xlu0 %951
        %955 = vset.pattern.permute.xlu0 0
        %956 = vperm.xlu0 %955, %v917
        %v957 = vpop.permute.xlu0 %956
        %960 = vset.pattern.permute.xlu0 0
        %961 = vperm.xlu0 %960, %v918
        %v962 = vpop.permute.xlu0 %961
        %965 = vset.pattern.permute.xlu0 0
        %966 = vperm.xlu0 %965, %v919
        %v967 = vpop.permute.xlu0 %966
        %970 = vset.pattern.permute.xlu0 0
        %971 = vperm.xlu0 %970, %v920
        %v972 = vpop.permute.xlu0 %971
        %975 = vset.pattern.permute.xlu0 0
        %976 = vperm.xlu0 %975, %v921
        %v977 = vpop.permute.xlu0 %976
        %980 = vset.pattern.permute.xlu0 0
        %981 = vperm.xlu0 %980, %v922
        %v982 = vpop.permute.xlu0 %981
        %985 = vset.pattern.permute.xlu0 0
        %986 = vperm.xlu0 %985, %v923
        %v987 = vpop.permute.xlu0 %986
        %990 = vset.pattern.permute.xlu0 0
        %991 = vperm.xlu0 %990, %v924
        %v992 = vpop.permute.xlu0 %991
        %995 = vset.pattern.permute.xlu0 0
        %996 = vperm.xlu0 %995, %v925
        %v997 = vpop.permute.xlu0 %996
        %1000 = vset.pattern.permute.xlu0 0
        %1001 = vperm.xlu0 %1000, %v926
        %v1002 = vpop.permute.xlu0 %1001
        %1005 = vset.pattern.permute.xlu0 0
        %1006 = vperm.xlu0 %1005, %v927
        %v1007 = vpop.permute.xlu0 %1006
        %v1009 = vmul.f32 %v896, %v932
        %v1010 = vmul.f32 %v897, %v937
        %v1011 = vmul.f32 %v898, %v942
        %v1012 = vmul.f32 %v899, %v947
        %v1013 = vmul.f32 %v900, %v952
        %v1014 = vmul.f32 %v901, %v957
        %v1015 = vmul.f32 %v902, %v962
        %v1016 = vmul.f32 %v903, %v967
        %v1017 = vmul.f32 %v904, %v972
        %v1018 = vmul.f32 %v905, %v977
        %v1019 = vmul.f32 %v906, %v982
        %v1020 = vmul.f32 %v907, %v987
        %v1021 = vmul.f32 %v908, %v992
        %v1022 = vmul.f32 %v909, %v997
        %v1023 = vmul.f32 %v910, %v1002
        %v1024 = vmul.f32 %v911, %v1007
        %v1025 = vadd.f32 %v1009, %v1010
        %v1026 = vrot.slane %v1025, 4
        %v1027 = vadd.f32 %v1025, %v1026
        %v1028 = vrot.slane %v1027, 2
        %v1029 = vadd.f32 %v1027, %v1028
        %v1030 = vrot.slane %v1029, 1
        %v1031 = vadd.f32 %v1029, %v1030
        %v1032 = vadd.f32 %v1011, %v1012
        %v1033 = vrot.slane %v1032, 4
        %v1034 = vadd.f32 %v1032, %v1033
        %v1035 = vrot.slane %v1034, 2
        %v1036 = vadd.f32 %v1034, %v1035
        %v1037 = vrot.slane %v1036, 1
        %v1038 = vadd.f32 %v1036, %v1037
        %v1039 = vadd.f32 %v1013, %v1014
        %v1040 = vrot.slane %v1039, 4
        %v1041 = vadd.f32 %v1039, %v1040
        %v1042 = vrot.slane %v1041, 2
        %v1043 = vadd.f32 %v1041, %v1042
        %v1044 = vrot.slane %v1043, 1
        %v1045 = vadd.f32 %v1043, %v1044
        %v1046 = vadd.f32 %v1015, %v1016
        %v1047 = vrot.slane %v1046, 4
        %v1048 = vadd.f32 %v1046, %v1047
        %v1049 = vrot.slane %v1048, 2
        %v1050 = vadd.f32 %v1048, %v1049
        %v1051 = vrot.slane %v1050, 1
        %v1052 = vadd.f32 %v1050, %v1051
        %v1053 = vadd.f32 %v1017, %v1018
        %v1054 = vrot.slane %v1053, 4
        %v1055 = vadd.f32 %v1053, %v1054
        %v1056 = vrot.slane %v1055, 2
        %v1057 = vadd.f32 %v1055, %v1056
        %v1058 = vrot.slane %v1057, 1
        %v1059 = vadd.f32 %v1057, %v1058
        %v1060 = vadd.f32 %v1019, %v1020
        %v1061 = vrot.slane %v1060, 4
        %v1062 = vadd.f32 %v1060, %v1061
        %v1063 = vrot.slane %v1062, 2
        %v1064 = vadd.f32 %v1062, %v1063
        %v1065 = vrot.slane %v1064, 1
        %v1066 = vadd.f32 %v1064, %v1065
        %v1067 = vadd.f32 %v1021, %v1022
        %v1068 = vrot.slane %v1067, 4
        %v1069 = vadd.f32 %v1067, %v1068
        %v1070 = vrot.slane %v1069, 2
        %v1071 = vadd.f32 %v1069, %v1070
        %v1072 = vrot.slane %v1071, 1
        %v1073 = vadd.f32 %v1071, %v1072
        %v1074 = vadd.f32 %v1023, %v1024
        %v1075 = vrot.slane %v1074, 4
        %v1076 = vadd.f32 %v1074, %v1075
        %v1077 = vrot.slane %v1076, 2
        %v1078 = vadd.f32 %v1076, %v1077
        %v1079 = vrot.slane %v1078, 1
        %v1080 = vadd.f32 %v1078, %v1079
        %vm1089 = vcmask 1041409
        %v1090 = vsel %vm1089, %v1038, %v1031
        %vm1091 = vcmask 1042434
        %v1092 = vsel %vm1091, %v1045, %v1090
        %vm1093 = vcmask 1043459
        %v1094 = vsel %vm1093, %v1052, %v1092
        %vm1095 = vcmask 1044484
        %v1096 = vsel %vm1095, %v1059, %v1094
        %vm1097 = vcmask 1045509
        %v1098 = vsel %vm1097, %v1066, %v1096
        %vm1099 = vcmask 1046534
        %v1100 = vsel %vm1099, %v1073, %v1098
        %vm1101 = vcmask 1047559
        %v1102 = vsel %vm1101, %v1080, %v1100
        %v1104 = vadd.f32 %v928, %v1102
        %1105 = vst [vmem:[#allocation2] sm:$0xff] %v1104
        %v1106 = vld [vmem:[#allocation3] sm:$0xff]
        %vm1107 = vcmask 7168
        %v1108 = vsel %vm1107, %v912, 0.0
        %v1109 = vsel %vm1107, %v913, 0.0
        %v1110 = vadd.f32 %v1108, %v1109
        %v1111 = vrot.slane %v1110, 4
        %v1112 = vadd.f32 %v1110, %v1111
        %v1113 = vrot.slane %v1112, 2
        %v1114 = vadd.f32 %v1112, %v1113
        %v1115 = vrot.slane %v1114, 1
        %v1116 = vadd.f32 %v1114, %v1115
        %v1117 = vsel %vm1107, %v914, 0.0
        %v1118 = vsel %vm1107, %v915, 0.0
        %v1119 = vadd.f32 %v1117, %v1118
        %v1120 = vrot.slane %v1119, 4
        %v1121 = vadd.f32 %v1119, %v1120
        %v1122 = vrot.slane %v1121, 2
        %v1123 = vadd.f32 %v1121, %v1122
        %v1124 = vrot.slane %v1123, 1
        %v1125 = vadd.f32 %v1123, %v1124
        %v1126 = vsel %vm1107, %v916, 0.0
        %v1127 = vsel %vm1107, %v917, 0.0
        %v1128 = vadd.f32 %v1126, %v1127
        %v1129 = vrot.slane %v1128, 4
        %v1130 = vadd.f32 %v1128, %v1129
        %v1131 = vrot.slane %v1130, 2
        %v1132 = vadd.f32 %v1130, %v1131
        %v1133 = vrot.slane %v1132, 1
        %v1134 = vadd.f32 %v1132, %v1133
        %v1135 = vsel %vm1107, %v918, 0.0
        %v1136 = vsel %vm1107, %v919, 0.0
        %v1137 = vadd.f32 %v1135, %v1136
        %v1138 = vrot.slane %v1137, 4
        %v1139 = vadd.f32 %v1137, %v1138
        %v1140 = vrot.slane %v1139, 2
        %v1141 = vadd.f32 %v1139, %v1140
        %v1142 = vrot.slane %v1141, 1
        %v1143 = vadd.f32 %v1141, %v1142
        %v1144 = vsel %vm1107, %v920, 0.0
        %v1145 = vsel %vm1107, %v921, 0.0
        %v1146 = vadd.f32 %v1144, %v1145
        %v1147 = vrot.slane %v1146, 4
        %v1148 = vadd.f32 %v1146, %v1147
        %v1149 = vrot.slane %v1148, 2
        %v1150 = vadd.f32 %v1148, %v1149
        %v1151 = vrot.slane %v1150, 1
        %v1152 = vadd.f32 %v1150, %v1151
        %v1153 = vsel %vm1107, %v922, 0.0
        %v1154 = vsel %vm1107, %v923, 0.0
        %v1155 = vadd.f32 %v1153, %v1154
        %v1156 = vrot.slane %v1155, 4
        %v1157 = vadd.f32 %v1155, %v1156
        %v1158 = vrot.slane %v1157, 2
        %v1159 = vadd.f32 %v1157, %v1158
        %v1160 = vrot.slane %v1159, 1
        %v1161 = vadd.f32 %v1159, %v1160
        %v1162 = vsel %vm1107, %v924, 0.0
        %v1163 = vsel %vm1107, %v925, 0.0
        %v1164 = vadd.f32 %v1162, %v1163
        %v1165 = vrot.slane %v1164, 4
        %v1166 = vadd.f32 %v1164, %v1165
        %v1167 = vrot.slane %v1166, 2
        %v1168 = vadd.f32 %v1166, %v1167
        %v1169 = vrot.slane %v1168, 1
        %v1170 = vadd.f32 %v1168, %v1169
        %v1171 = vsel %vm1107, %v926, 0.0
        %v1172 = vsel %vm1107, %v927, 0.0
        %v1173 = vadd.f32 %v1171, %v1172
        %v1174 = vrot.slane %v1173, 4
        %v1175 = vadd.f32 %v1173, %v1174
        %v1176 = vrot.slane %v1175, 2
        %v1177 = vadd.f32 %v1175, %v1176
        %v1178 = vrot.slane %v1177, 1
        %v1179 = vadd.f32 %v1177, %v1178
        %v1188 = vsel %vm1089, %v1125, %v1116
        %v1189 = vsel %vm1091, %v1134, %v1188
        %v1190 = vsel %vm1093, %v1143, %v1189
        %v1191 = vsel %vm1095, %v1152, %v1190
        %v1192 = vsel %vm1097, %v1161, %v1191
        %v1193 = vsel %vm1099, %v1170, %v1192
        %v1194 = vsel %vm1101, %v1179, %v1193
        %v1196 = vadd.f32 %v1106, %v1194
        %1197 = vst.msk [vmem:[#allocation3] sm:$0xff] %vm1107, %v1196
        %p1198 = scmp.eq.s32.totalorder %s22, 1
        // Predicated region
        $region121: #{tpu_custom_call.1} parent=107 // pred_check
          %p1199 = pneg %p1198
        $region122: #{tpu_custom_call.1} parent=107 // pred_check_branch
          %1201 = sbr.rel (%p1199) target = $region124
        $region123: #{tpu_custom_call.1} parent=107 // pred_region
          %v1202 = vld [vmem:[#allocation2] sm:$0xff]
          %v1203 = vld [vmem:[#allocation3] sm:$0xff]
          %v1204 = vmax.f32 %v1203, 1e-09
          %1206 = vset.pattern.permute.xlu0 0
          %1207 = vperm.xlu0 %1206, %v1204
          %v1208 = vpop.permute.xlu0 %1207
          %v1210 = vrcp.pop %v1208
          %v1211 = vmul.f32 %v1202, %v1210
          %v1212 = vmul.f32 %v1211, %v1211
          %1213 = vadd.xlane.f32.xlu0 %v1212
          %v1214 = vpop.xlane.xlu0 %1213
          %v1215 = vmax.f32 %v1214, 1e-24
          %v1216 = vrsqrt.pop %v1215
          %v1217 = vmul.f32 %v1211, %v1216
          %1218 = vst [vmem:[#allocation6] sm:$0xff] %v1217
        $region124: #{tpu_custom_call.1} parent=107 // pred_fallthru
          _
        // Predicated region
        $region125: #{tpu_custom_call.1} parent=107 // pred_check
          %p1219 = pneg %p166
        $region126: #{tpu_custom_call.1} parent=107 // pred_check_branch
          %1221 = sbr.rel (%p1219) target = $region128
        $region127: #{tpu_custom_call.1} parent=107 // pred_region
          %s1223 = ssub.s32 128, 128
          %1224 = vsyncadd [#allocation7], %s1223
          %s1225 = smul.addr %s21, 128
          %s1226 = scalar_lea.hbm %s5, %s1225
          %s1228 = sshll.u32 [#allocation6], 4
          %s1229 = int_to_ptr.vmem [resolvable:$true] %s1228
          %1231 = dma.vmem_to_hbm [thread:$0]  %s1229, 128, %s1226, [#allocation7]
        $region128: #{tpu_custom_call.1} parent=107 // pred_fallthru
          _
        // Predicated region
        $region129: #{tpu_custom_call.1} parent=107 // pred_check
          %p1232 = pneg %p166
        $region130: #{tpu_custom_call.1} parent=107 // pred_check_branch
          %1234 = sbr.rel (%p1232) target = $region132
        $region131: #{tpu_custom_call.1} parent=107 // pred_region
          %1235 = dma.done [#allocation7], 128
        $region132: #{tpu_custom_call.1} parent=107 // pred_fallthru
          _
      $region108: #{tpu_custom_call.1} parent=5 // pred_fallthru
        _
      %p1236 = scmp.le.s32.totalorder 2, %s12
      // Predicated region
      $region133: #{tpu_custom_call.1} parent=5 // pred_check
        %p1237 = pneg %p1236
      $region134: #{tpu_custom_call.1} parent=5 // pred_check_branch
        %1239 = sbr.rel (%p1237) target = $region136
      $region135: #{tpu_custom_call.1} parent=5 // pred_region
        %s1240 = ssub.s32 %s12, 2
      $region136: #{tpu_custom_call.1} parent=5 // pred_fallthru
        _
    $region6: #{tpu_custom_call.1} parent=1 // loop_footer
      %s16 = sadd.s32 1, %s12
    $region7: #{tpu_custom_call.1} parent=1 // loop_footer_branch
      %11 = sbr.rel target = $region3
    $region8: #{tpu_custom_call.1} parent=1 // loop_exit
      _
    %1241 = vsyncpa [#allocation7], 1
    %s1242 = scalar_lea.sflag [#allocation7], 1
    %1243 = vsyncpa %s1242, 1

</llo_original>
